<compile_context>
chip_gen: v7x
topology: tpu7x:2x2x1
jax: 0.10.0
libtpu: 0.0.40
codegen_flags: <defaults>
</compile_context>

<pallas_src>
import numpy as np
import jax
import jax.numpy as jnp
from jax.experimental import pallas as pl
from jax.experimental.pallas import tpu as pltpu


def _interp_matrix_t(t_out, t_in, scale=1.0, dtype=jnp.float32):
    """(t_in, t_out) matrix M^T reproducing F.interpolate(mode='linear',
    align_corners=False) along time for channel-major data: y_ct = x_ct @ M^T.
    `scale` is folded in (used to absorb the 3x residual factor for free)."""
    j = np.arange(t_out, dtype=np.float64)
    s = t_in / t_out
    src = np.maximum((j + 0.5) * s - 0.5, 0.0)
    i0 = np.minimum(np.floor(src).astype(np.int64), t_in - 1)
    i1 = np.minimum(i0 + 1, t_in - 1)
    w1 = src - i0
    w0 = 1.0 - w1
    m = np.zeros((t_in, t_out), dtype=np.float64)
    m[i0, np.arange(t_out)] += w0
    m[i1, np.arange(t_out)] += w1
    return jnp.asarray(scale * m, dtype=dtype)


def temporal_mixer_kernel(f1_ref, f2_ref, f3_ref, f4_ref,
                          wp1_ref, wp2_ref, wp3_ref, wp4_ref, bpt_ref,
                          m2t_ref, m3t_ref, m4t_ref,
                          w3_ref, b3_ref,
                          out_ref):
    bpt = bpt_ref[...]                                    # (E, 4) projection biases

    # nn.Linear projections in channel-major (NCT) layout with native (out,in)
    # PyTorch weights:  P_i = W_i @ f_i + b_i.
    p4 = jnp.dot(wp4_ref[...], f4_ref[...],
                 preferred_element_type=jnp.float32) + bpt[:, 3:4]    # (E, T4)
    p3 = jnp.dot(wp3_ref[...], f3_ref[...],
                 preferred_element_type=jnp.float32) + bpt[:, 2:3]    # (E, T3)
    p2 = jnp.dot(wp2_ref[...], f2_ref[...],
                 preferred_element_type=jnp.float32) + bpt[:, 1:2]    # (E, T2)
    # wp1 / bpt[:, 0] already carry the 3x residual factor (folded in wrapper).
    f1s = jnp.dot(wp1_ref[...], f1_ref[...],
                  preferred_element_type=jnp.float32) + bpt[:, 0:1]   # (E, T1) = 3*F1

    # Linear interpolation (align_corners=False) as right-matmuls over time.
    # m3t / m2t already carry the 3x residual factor.
    F4  = jnp.dot(p4, m4t_ref[...], preferred_element_type=jnp.float32)  # (E, T1)
    f3s = jnp.dot(p3, m3t_ref[...], preferred_element_type=jnp.float32)  # (E, T1) = 3*F3
    f2s = jnp.dot(p2, m2t_ref[...], preferred_element_type=jnp.float32)  # (E, T1) = 3*F2

    # Nine 1x1 convs + residual chain folded into ONE (3E, E) @ (E, T1) matmul
    # (the zero block for the F4 pass-through was removed) plus the pre-scaled
    # residuals added branch-wise (no extra full-slab temp + add).
    ivt = (jnp.dot(w3_ref[...], F4, preferred_element_type=jnp.float32)
           + b3_ref[...]
           + jnp.concatenate([f3s, f2s, f1s], axis=0))                   # (3E, T1)

    # Assemble the (4E, T1) slab (sublane offsets are multiples of 8) and store
    # it time-major so the output lane dimension is 4E (dense vst), not T1.
    slab = jnp.concatenate([F4, ivt], axis=0)                            # (4E, T1)
    out_ref[...] = slab.T                                                # (T1, 4E)


def temporal_mixer(f1, f2, f3, f4, wp1, wp2, wp3, wp4, bp, wc, bc,
                   *, time_major_output=False):
    """f_i: (B, C_i, T_i) NCT (PyTorch layout).  wp_i: (E, C_i) nn.Linear
    weights; bp: (4, E) linear biases (rows f1..f4); wc: (9, E, E) Conv1d
    weights in (out, in) layout; bc: (9, E) conv biases.
    Returns (B, 4*E, T1) exactly like the PyTorch module (or (B, T1, 4*E)
    when time_major_output=True, skipping the layout transpose)."""
    B, C1, T1 = f1.shape
    _, C2, T2 = f2.shape
    _, C3, T3 = f3.shape
    _, C4, T4 = f4.shape
    E = wp1.shape[0]

    # --- one-time, parameter-only prep (no data-sized work) -----------------
    # Fold the 3x residual factor into the f1 projection and the f2/f3 interp
    # matrices.  The F4 path stays unscaled (it feeds both w3 and the output).
    m2t = _interp_matrix_t(T1, T2, scale=3.0)   # (T2, T1)
    m3t = _interp_matrix_t(T1, T3, scale=3.0)   # (T3, T1)
    m4t = _interp_matrix_t(T1, T4, scale=1.0)   # (T4, T1)
    wp1s = 3.0 * wp1
    bpt = jnp.stack([3.0 * bp[0], bp[1], bp[2], bp[3]], axis=1)           # (E, 4)

    # Sum the three conv weights feeding each output branch (f3, f2, f1); the
    # F4 pass-through needs no weight block at all.
    w3 = jnp.concatenate([wc[0] + wc[3] + wc[6],      # linear1+4+7  (f3 branch)
                          wc[1] + wc[4] + wc[7],      # linear2+5+8  (f2 branch)
                          wc[2] + wc[5] + wc[8]],     # linear3+6+9  (f1 branch)
                         axis=0)                                          # (3E, E)
    b3 = jnp.concatenate([bc[0] + bc[3] + bc[6],
                          bc[1] + bc[4] + bc[7],
                          bc[2] + bc[5] + bc[8]], axis=0).reshape(3 * E, 1)

    out_tm = pl.pallas_call(
        temporal_mixer_kernel,
        out_shape=jax.ShapeDtypeStruct((B, T1, 4 * E), jnp.float32),
        grid_spec=pltpu.PrefetchScalarGridSpec(
            num_scalar_prefetch=0,
            grid=(B,),
            in_specs=[
                pl.BlockSpec((None, C1, T1), lambda b: (b, 0, 0)),
                pl.BlockSpec((None, C2, T2), lambda b: (b, 0, 0)),
                pl.BlockSpec((None, C3, T3), lambda b: (b, 0, 0)),
                pl.BlockSpec((None, C4, T4), lambda b: (b, 0, 0)),
                pl.BlockSpec((E, C1), lambda b: (0, 0)),
                pl.BlockSpec((E, C2), lambda b: (0, 0)),
                pl.BlockSpec((E, C3), lambda b: (0, 0)),
                pl.BlockSpec((E, C4), lambda b: (0, 0)),
                pl.BlockSpec((E, 4), lambda b: (0, 0)),
                pl.BlockSpec((T2, T1), lambda b: (0, 0)),
                pl.BlockSpec((T3, T1), lambda b: (0, 0)),
                pl.BlockSpec((T4, T1), lambda b: (0, 0)),
                pl.BlockSpec((3 * E, E), lambda b: (0, 0)),
                pl.BlockSpec((3 * E, 1), lambda b: (0, 0)),
            ],
            out_specs=pl.BlockSpec((None, T1, 4 * E), lambda b: (b, 0, 0)),
        ),
        compiler_params=pltpu.CompilerParams(
            # Batch steps are independent: one batch per TensorCore on v7x.
            dimension_semantics=("parallel",)),
    )(f1, f2, f3, f4, wp1s, wp2, wp3, wp4, bpt, m2t, m3t, m4t, w3, b3)

    if time_major_output:
        return out_tm                                   # (B, T1, 4E)
    # Layout plumbing back to the PyTorch module's NCT output layout.
    return jnp.transpose(out_tm, (0, 2, 1))             # (B, 4E, T1)


# ----------------------- pure-JAX reference (for checking) -----------------
def _interp_linear_acf(x_bet, t_out):
    """Gather-based replica of F.interpolate(mode='linear', align_corners=False)."""
    t_in = x_bet.shape[-1]
    j = jnp.arange(t_out, dtype=jnp.float32)
    src = jnp.maximum((j + 0.5) * (t_in / t_out) - 0.5, 0.0)
    i0 = jnp.clip(jnp.floor(src).astype(jnp.int32), 0, t_in - 1)
    i1 = jnp.minimum(i0 + 1, t_in - 1)
    w1 = src - i0.astype(jnp.float32)
    w0 = 1.0 - w1
    return x_bet[..., i0] * w0 + x_bet[..., i1] * w1


def reference_forward(f1, f2, f3, f4, wp1, wp2, wp3, wp4, bp, wc, bc):
    T1 = f1.shape[2]

    def lin_then_permute(x, w, b):          # (B, C, T), (E, C) -> (B, E, T)
        return jnp.einsum('bct,ec->bet', x, w) + b[None, :, None]

    _f4 = _interp_linear_acf(lin_then_permute(f4, wp4, bp[3]), T1)
    _f3 = _interp_linear_acf(lin_then_permute(f3, wp3, bp[2]), T1)
    _f2 = _interp_linear_acf(lin_then_permute(f2, wp2, bp[1]), T1)
    _f1 = lin_then_permute(f1, wp1, bp[0])

    def conv1x1(x_bet, k):                  # wc[k]: (out, in)
        return jnp.einsum('bit,oi->bot', x_bet, wc[k]) + bc[k][None, :, None]

    _f3_v = conv1x1(_f4, 0) + _f3
    _f2_v = conv1x1(_f4, 1) + _f2
    _f1_v = conv1x1(_f4, 2) + _f1
    _f3_t = conv1x1(_f4, 3) + _f3
    _f2_t = conv1x1(_f4, 4) + _f2
    _f1_t = conv1x1(_f4, 5) + _f1
    _f3_ivt = conv1x1(_f4, 6) + _f3 + _f3_v + _f3_t
    _f2_ivt = conv1x1(_f4, 7) + _f2 + _f2_v + _f2_t
    _f1_ivt = conv1x1(_f4, 8) + _f1 + _f1_v + _f1_t
    return jnp.concatenate([_f4, _f3_ivt, _f2_ivt, _f1_ivt], axis=1)


if __name__ == "__main__":
    B = 2
    E = 32                               # embedding_dim
    T1, T2, T3, T4 = 16, 8, 8, 4         # temporal lengths of f1..f4
    C1, C2, C3, C4 = 16, 24, 32, 48      # inter_channels

    key = jax.random.PRNGKey(0)
    ks = jax.random.split(key, 16)

    f1 = jax.random.normal(ks[0], (B, C1, T1), jnp.float32)
    f2 = jax.random.normal(ks[1], (B, C2, T2), jnp.float32)
    f3 = jax.random.normal(ks[2], (B, C3, T3), jnp.float32)
    f4 = jax.random.normal(ks[3], (B, C4, T4), jnp.float32)

    # Deterministic synthetic parameters in PyTorch-native layouts:
    # nn.Linear weight (E, C_i); Conv1d(k=1) weight (E_out, E_in); biases (E,).
    wp1 = 0.1 * jax.random.normal(ks[4], (E, C1), jnp.float32)
    wp2 = 0.1 * jax.random.normal(ks[5], (E, C2), jnp.float32)
    wp3 = 0.1 * jax.random.normal(ks[6], (E, C3), jnp.float32)
    wp4 = 0.1 * jax.random.normal(ks[7], (E, C4), jnp.float32)
    bp = 0.1 * jax.random.normal(ks[8], (4, E), jnp.float32)
    wc = 0.1 * jax.random.normal(ks[9], (9, E, E), jnp.float32)
    bc = 0.1 * jax.random.normal(ks[10], (9, E), jnp.float32)

    out = temporal_mixer(f1, f2, f3, f4, wp1, wp2, wp3, wp4, bp, wc, bc)
    out = jax.block_until_ready(out)

    ref = reference_forward(f1, f2, f3, f4, wp1, wp2, wp3, wp4, bp, wc, bc)
    assert out.shape == (B, 4 * E, T1), out.shape
    assert jnp.allclose(out, ref, rtol=1e-4, atol=1e-4), (
        float(jnp.max(jnp.abs(out - ref))))

    print("KERNEL_OK")
</pallas_src>

<mosaic_0001>
module attributes {stable_mosaic.version = 11 : i64} {
  func.func @temporal_mixer_kernel(%arg0: i32, %arg1: memref<1x16x16xf32, #tpu.memory_space<vmem>>, %arg2: memref<1x24x8xf32, #tpu.memory_space<vmem>>, %arg3: memref<1x32x8xf32, #tpu.memory_space<vmem>>, %arg4: memref<1x48x4xf32, #tpu.memory_space<vmem>>, %arg5: memref<32x16xf32, #tpu.memory_space<vmem>>, %arg6: memref<32x24xf32, #tpu.memory_space<vmem>>, %arg7: memref<32x32xf32, #tpu.memory_space<vmem>>, %arg8: memref<32x48xf32, #tpu.memory_space<vmem>>, %arg9: memref<32x4xf32, #tpu.memory_space<vmem>>, %arg10: memref<8x16xf32, #tpu.memory_space<vmem>>, %arg11: memref<8x16xf32, #tpu.memory_space<vmem>>, %arg12: memref<4x16xf32, #tpu.memory_space<vmem>>, %arg13: memref<96x32xf32, #tpu.memory_space<vmem>>, %arg14: memref<96x1xf32, #tpu.memory_space<vmem>>, %arg15: memref<1x16x128xf32, #tpu.memory_space<vmem>>) attributes {dimension_semantics = [#tpu.dimension_semantics<parallel>], iteration_bounds = array<i64: 2>, scalar_prefetch = 0 : i64, scratch_operands = 0 : i64, tpu.core_type = #tpu.core_type<tc>, window_params = [{transform_indices = @transform_0, window_bounds = array<i64: 1, 16, 16>}, {transform_indices = @transform_1, window_bounds = array<i64: 1, 24, 8>}, {transform_indices = @transform_2, window_bounds = array<i64: 1, 32, 8>}, {transform_indices = @transform_3, window_bounds = array<i64: 1, 48, 4>}, {pipeline_mode = #tpu.pipeline_mode<synchronous>, transform_indices = @transform_4, window_bounds = array<i64: 32, 16>}, {pipeline_mode = #tpu.pipeline_mode<synchronous>, transform_indices = @transform_5, window_bounds = array<i64: 32, 24>}, {pipeline_mode = #tpu.pipeline_mode<synchronous>, transform_indices = @transform_6, window_bounds = array<i64: 32, 32>}, {pipeline_mode = #tpu.pipeline_mode<synchronous>, transform_indices = @transform_7, window_bounds = array<i64: 32, 48>}, {pipeline_mode = #tpu.pipeline_mode<synchronous>, transform_indices = @transform_8, window_bounds = array<i64: 32, 4>}, {pipeline_mode = #tpu.pipeline_mode<synchronous>, transform_indices = @transform_9, window_bounds = array<i64: 8, 16>}, {pipeline_mode = #tpu.pipeline_mode<synchronous>, transform_indices = @transform_10, window_bounds = array<i64: 8, 16>}, {pipeline_mode = #tpu.pipeline_mode<synchronous>, transform_indices = @transform_11, window_bounds = array<i64: 4, 16>}, {pipeline_mode = #tpu.pipeline_mode<synchronous>, transform_indices = @transform_12, window_bounds = array<i64: 96, 32>}, {pipeline_mode = #tpu.pipeline_mode<synchronous>, transform_indices = @transform_13, window_bounds = array<i64: 96, 1>}, {transform_indices = @transform_14, window_bounds = array<i64: 1, 16, 128>}]} {
    %c0 = arith.constant 0 : index
    %c0_0 = arith.constant 0 : index
    %0 = vector.load %arg9[%c0, %c0_0] : memref<32x4xf32, #tpu.memory_space<vmem>>, vector<32x4xf32>
    %c0_1 = arith.constant 0 : index
    %c0_2 = arith.constant 0 : index
    %1 = vector.load %arg8[%c0_1, %c0_2] : memref<32x48xf32, #tpu.memory_space<vmem>>, vector<32x48xf32>
    %c0_3 = arith.constant 0 : index
    %c0_4 = arith.constant 0 : index
    %c0_5 = arith.constant 0 : index
    %2 = vector.load %arg4[%c0_3, %c0_4, %c0_5] : memref<1x48x4xf32, #tpu.memory_space<vmem>>, vector<1x48x4xf32>
    %3 = vector.shape_cast %2 : vector<1x48x4xf32> to vector<48x4xf32>
    %cst = arith.constant dense<0.000000e+00> : vector<32x4xf32>
    %4 = tpu.matmul %1, %3, %cst {dimension_numbers = #tpu.dot_dimension_numbers<[1], [0], [0], [1], [0, 0, 1, 1], [], []>} : vector<32x48xf32>, vector<48x4xf32>, vector<32x4xf32> -> vector<32x4xf32>
    %5 = vector.extract_strided_slice %0 {offsets = [0, 3], sizes = [32, 1], strides = [1, 1]} : vector<32x4xf32> to vector<32x1xf32>
    %6 = vector.broadcast %5 : vector<32x1xf32> to vector<32x4xf32>
    %7 = arith.addf %4, %6 : vector<32x4xf32>
    %c0_6 = arith.constant 0 : index
    %c0_7 = arith.constant 0 : index
    %8 = vector.load %arg7[%c0_6, %c0_7] : memref<32x32xf32, #tpu.memory_space<vmem>>, vector<32x32xf32>
    %c0_8 = arith.constant 0 : index
    %c0_9 = arith.constant 0 : index
    %c0_10 = arith.constant 0 : index
    %9 = vector.load %arg3[%c0_8, %c0_9, %c0_10] : memref<1x32x8xf32, #tpu.memory_space<vmem>>, vector<1x32x8xf32>
    %10 = vector.shape_cast %9 : vector<1x32x8xf32> to vector<32x8xf32>
    %cst_11 = arith.constant dense<0.000000e+00> : vector<32x8xf32>
    %11 = tpu.matmul %8, %10, %cst_11 {dimension_numbers = #tpu.dot_dimension_numbers<[1], [0], [0], [1], [0, 0, 1, 1], [], []>} : vector<32x32xf32>, vector<32x8xf32>, vector<32x8xf32> -> vector<32x8xf32>
    %12 = vector.extract_strided_slice %0 {offsets = [0, 2], sizes = [32, 1], strides = [1, 1]} : vector<32x4xf32> to vector<32x1xf32>
    %13 = vector.broadcast %12 : vector<32x1xf32> to vector<32x8xf32>
    %14 = arith.addf %11, %13 : vector<32x8xf32>
    %c0_12 = arith.constant 0 : index
    %c0_13 = arith.constant 0 : index
    %15 = vector.load %arg6[%c0_12, %c0_13] : memref<32x24xf32, #tpu.memory_space<vmem>>, vector<32x24xf32>
    %c0_14 = arith.constant 0 : index
    %c0_15 = arith.constant 0 : index
    %c0_16 = arith.constant 0 : index
    %16 = vector.load %arg2[%c0_14, %c0_15, %c0_16] : memref<1x24x8xf32, #tpu.memory_space<vmem>>, vector<1x24x8xf32>
    %17 = vector.shape_cast %16 : vector<1x24x8xf32> to vector<24x8xf32>
    %cst_17 = arith.constant dense<0.000000e+00> : vector<32x8xf32>
    %18 = tpu.matmul %15, %17, %cst_17 {dimension_numbers = #tpu.dot_dimension_numbers<[1], [0], [0], [1], [0, 0, 1, 1], [], []>} : vector<32x24xf32>, vector<24x8xf32>, vector<32x8xf32> -> vector<32x8xf32>
    %19 = vector.extract_strided_slice %0 {offsets = [0, 1], sizes = [32, 1], strides = [1, 1]} : vector<32x4xf32> to vector<32x1xf32>
    %20 = vector.broadcast %19 : vector<32x1xf32> to vector<32x8xf32>
    %21 = arith.addf %18, %20 : vector<32x8xf32>
    %c0_18 = arith.constant 0 : index
    %c0_19 = arith.constant 0 : index
    %22 = vector.load %arg5[%c0_18, %c0_19] : memref<32x16xf32, #tpu.memory_space<vmem>>, vector<32x16xf32>
    %c0_20 = arith.constant 0 : index
    %c0_21 = arith.constant 0 : index
    %c0_22 = arith.constant 0 : index
    %23 = vector.load %arg1[%c0_20, %c0_21, %c0_22] : memref<1x16x16xf32, #tpu.memory_space<vmem>>, vector<1x16x16xf32>
    %24 = vector.shape_cast %23 : vector<1x16x16xf32> to vector<16x16xf32>
    %cst_23 = arith.constant dense<0.000000e+00> : vector<32x16xf32>
    %25 = tpu.matmul %22, %24, %cst_23 {dimension_numbers = #tpu.dot_dimension_numbers<[1], [0], [0], [1], [0, 0, 1, 1], [], []>} : vector<32x16xf32>, vector<16x16xf32>, vector<32x16xf32> -> vector<32x16xf32>
    %26 = vector.extract_strided_slice %0 {offsets = [0, 0], sizes = [32, 1], strides = [1, 1]} : vector<32x4xf32> to vector<32x1xf32>
    %27 = vector.broadcast %26 : vector<32x1xf32> to vector<32x16xf32>
    %28 = arith.addf %25, %27 : vector<32x16xf32>
    %c0_24 = arith.constant 0 : index
    %c0_25 = arith.constant 0 : index
    %29 = vector.load %arg12[%c0_24, %c0_25] : memref<4x16xf32, #tpu.memory_space<vmem>>, vector<4x16xf32>
    %cst_26 = arith.constant dense<0.000000e+00> : vector<32x16xf32>
    %30 = tpu.matmul %7, %29, %cst_26 {dimension_numbers = #tpu.dot_dimension_numbers<[1], [0], [0], [1], [0, 0, 1, 1], [], []>} : vector<32x4xf32>, vector<4x16xf32>, vector<32x16xf32> -> vector<32x16xf32>
    %c0_27 = arith.constant 0 : index
    %c0_28 = arith.constant 0 : index
    %31 = vector.load %arg11[%c0_27, %c0_28] : memref<8x16xf32, #tpu.memory_space<vmem>>, vector<8x16xf32>
    %cst_29 = arith.constant dense<0.000000e+00> : vector<32x16xf32>
    %32 = tpu.matmul %14, %31, %cst_29 {dimension_numbers = #tpu.dot_dimension_numbers<[1], [0], [0], [1], [0, 0, 1, 1], [], []>} : vector<32x8xf32>, vector<8x16xf32>, vector<32x16xf32> -> vector<32x16xf32>
    %c0_30 = arith.constant 0 : index
    %c0_31 = arith.constant 0 : index
    %33 = vector.load %arg10[%c0_30, %c0_31] : memref<8x16xf32, #tpu.memory_space<vmem>>, vector<8x16xf32>
    %cst_32 = arith.constant dense<0.000000e+00> : vector<32x16xf32>
    %34 = tpu.matmul %21, %33, %cst_32 {dimension_numbers = #tpu.dot_dimension_numbers<[1], [0], [0], [1], [0, 0, 1, 1], [], []>} : vector<32x8xf32>, vector<8x16xf32>, vector<32x16xf32> -> vector<32x16xf32>
    %c0_33 = arith.constant 0 : index
    %c0_34 = arith.constant 0 : index
    %35 = vector.load %arg13[%c0_33, %c0_34] : memref<96x32xf32, #tpu.memory_space<vmem>>, vector<96x32xf32>
    %cst_35 = arith.constant dense<0.000000e+00> : vector<96x16xf32>
    %36 = tpu.matmul %35, %30, %cst_35 {dimension_numbers = #tpu.dot_dimension_numbers<[1], [0], [0], [1], [0, 0, 1, 1], [], []>} : vector<96x32xf32>, vector<32x16xf32>, vector<96x16xf32> -> vector<96x16xf32>
    %c0_36 = arith.constant 0 : index
    %c0_37 = arith.constant 0 : index
    %37 = vector.load %arg14[%c0_36, %c0_37] : memref<96x1xf32, #tpu.memory_space<vmem>>, vector<96x1xf32>
    %38 = vector.broadcast %37 : vector<96x1xf32> to vector<96x16xf32>
    %39 = arith.addf %36, %38 : vector<96x16xf32>
    %40 = tpu.concatenate %32, %34, %28 in 0 : vector<32x16xf32>, vector<32x16xf32>, vector<32x16xf32> -> vector<96x16xf32>
    %41 = arith.addf %39, %40 : vector<96x16xf32>
    %42 = tpu.concatenate %30, %41 in 0 : vector<32x16xf32>, vector<96x16xf32> -> vector<128x16xf32>
    %43 = tpu.transpose %42, [1, 0] : vector<128x16xf32> -> vector<16x128xf32>
    %c0_38 = arith.constant 0 : index
    %c0_39 = arith.constant 0 : index
    %c0_40 = arith.constant 0 : index
    %44 = vector.load %arg15[%c0_38, %c0_39, %c0_40] : memref<1x16x128xf32, #tpu.memory_space<vmem>>, vector<1x16x128xf32>
    %45 = vector.shape_cast %44 : vector<1x16x128xf32> to vector<16x128xf32>
    %46 = vector.shape_cast %43 : vector<16x128xf32> to vector<1x16x128xf32>
    tpu.vector_store %arg15[%c0_38, %c0_39, %c0_40], %46 {strides = array<i32>} : memref<1x16x128xf32, #tpu.memory_space<vmem>>, vector<1x16x128xf32>,
    return
  }
  func.func @transform_0(%arg0: i32) -> (i32, i32, i32) {
    %c0_i32 = arith.constant 0 : i32
    %c0_i32_0 = arith.constant 0 : i32
    %c0_i32_1 = arith.constant 0 : i32
    return %arg0, %c0_i32, %c0_i32_0 : i32, i32, i32
  }
  func.func @transform_1(%arg0: i32) -> (i32, i32, i32) {
    %c0_i32 = arith.constant 0 : i32
    %c0_i32_0 = arith.constant 0 : i32
    %c0_i32_1 = arith.constant 0 : i32
    return %arg0, %c0_i32, %c0_i32_0 : i32, i32, i32
  }
  func.func @transform_2(%arg0: i32) -> (i32, i32, i32) {
    %c0_i32 = arith.constant 0 : i32
    %c0_i32_0 = arith.constant 0 : i32
    %c0_i32_1 = arith.constant 0 : i32
    return %arg0, %c0_i32, %c0_i32_0 : i32, i32, i32
  }
  func.func @transform_3(%arg0: i32) -> (i32, i32, i32) {
    %c0_i32 = arith.constant 0 : i32
    %c0_i32_0 = arith.constant 0 : i32
    %c0_i32_1 = arith.constant 0 : i32
    return %arg0, %c0_i32, %c0_i32_0 : i32, i32, i32
  }
  func.func @transform_4(%arg0: i32) -> (i32, i32) {
    %c0_i32 = arith.constant 0 : i32
    %c0_i32_0 = arith.constant 0 : i32
    %c0_i32_1 = arith.constant 0 : i32
    return %c0_i32, %c0_i32_0 : i32, i32
  }
  func.func @transform_5(%arg0: i32) -> (i32, i32) {
    %c0_i32 = arith.constant 0 : i32
    %c0_i32_0 = arith.constant 0 : i32
    %c0_i32_1 = arith.constant 0 : i32
    return %c0_i32, %c0_i32_0 : i32, i32
  }
  func.func @transform_6(%arg0: i32) -> (i32, i32) {
    %c0_i32 = arith.constant 0 : i32
    %c0_i32_0 = arith.constant 0 : i32
    %c0_i32_1 = arith.constant 0 : i32
    return %c0_i32, %c0_i32_0 : i32, i32
  }
  func.func @transform_7(%arg0: i32) -> (i32, i32) {
    %c0_i32 = arith.constant 0 : i32
    %c0_i32_0 = arith.constant 0 : i32
    %c0_i32_1 = arith.constant 0 : i32
    return %c0_i32, %c0_i32_0 : i32, i32
  }
  func.func @transform_8(%arg0: i32) -> (i32, i32) {
    %c0_i32 = arith.constant 0 : i32
    %c0_i32_0 = arith.constant 0 : i32
    %c0_i32_1 = arith.constant 0 : i32
    return %c0_i32, %c0_i32_0 : i32, i32
  }
  func.func @transform_9(%arg0: i32) -> (i32, i32) {
    %c0_i32 = arith.constant 0 : i32
    %c0_i32_0 = arith.constant 0 : i32
    %c0_i32_1 = arith.constant 0 : i32
    return %c0_i32, %c0_i32_0 : i32, i32
  }
  func.func @transform_10(%arg0: i32) -> (i32, i32) {
    %c0_i32 = arith.constant 0 : i32
    %c0_i32_0 = arith.constant 0 : i32
    %c0_i32_1 = arith.constant 0 : i32
    return %c0_i32, %c0_i32_0 : i32, i32
  }
  func.func @transform_11(%arg0: i32) -> (i32, i32) {
    %c0_i32 = arith.constant 0 : i32
    %c0_i32_0 = arith.constant 0 : i32
    %c0_i32_1 = arith.constant 0 : i32
    return %c0_i32, %c0_i32_0 : i32, i32
  }
  func.func @transform_12(%arg0: i32) -> (i32, i32) {
    %c0_i32 = arith.constant 0 : i32
    %c0_i32_0 = arith.constant 0 : i32
    %c0_i32_1 = arith.constant 0 : i32
    return %c0_i32, %c0_i32_0 : i32, i32
  }
  func.func @transform_13(%arg0: i32) -> (i32, i32) {
    %c0_i32 = arith.constant 0 : i32
    %c0_i32_0 = arith.constant 0 : i32
    %c0_i32_1 = arith.constant 0 : i32
    return %c0_i32, %c0_i32_0 : i32, i32
  }
  func.func @transform_14(%arg0: i32) -> (i32, i32, i32) {
    %c0_i32 = arith.constant 0 : i32
    %c0_i32_0 = arith.constant 0 : i32
    %c0_i32_1 = arith.constant 0 : i32
    return %arg0, %c0_i32, %c0_i32_0 : i32, i32, i32
  }
}

</mosaic_0001>

<llo_original>
// kernel: tpu_custom_call.1
$region0: #{tpu_custom_call.1}
  #allocation0 [shape = 'u32[]', space=smem, size = 0x4, offset = 0x4, fixed_abs, tag = 'smem constant byte address 0x4 - core index']
  #allocation1 [shape = 'u32[144,128]{1,0:T(1,128)}', space=vmem, size = 0x12000, scoped, tag = 'internal scratch']
  %s0 = inlined_call_operand.vmem [shape: f32[2,16,16], index: 0, kind: input, shape index: {}]
  %s1 = inlined_call_operand.vmem [shape: f32[2,24,8], index: 1, kind: input, shape index: {}]
  %s2 = inlined_call_operand.vmem [shape: f32[2,32,8], index: 2, kind: input, shape index: {}]
  %s3 = inlined_call_operand.vmem [shape: f32[2,48,4], index: 3, kind: input, shape index: {}]
  %s4 = inlined_call_operand.vmem [shape: f32[32,16], index: 4, kind: input, shape index: {}]
  %s5 = inlined_call_operand.vmem [shape: f32[32,24], index: 5, kind: input, shape index: {}]
  %s6 = inlined_call_operand.vmem [shape: f32[32,32], index: 6, kind: input, shape index: {}]
  %s7 = inlined_call_operand.vmem [shape: f32[32,48], index: 7, kind: input, shape index: {}]
  %s8 = inlined_call_operand.vmem [shape: f32[32,4], index: 8, kind: input, shape index: {}]
  %s9 = inlined_call_operand.vmem [shape: f32[8,16], index: 9, kind: input, shape index: {}]
  %s10 = inlined_call_operand.vmem [shape: f32[8,16], index: 10, kind: input, shape index: {}]
  %s11 = inlined_call_operand.vmem [shape: f32[4,16], index: 11, kind: input, shape index: {}]
  %s12 = inlined_call_operand.vmem [shape: f32[96,32], index: 12, kind: input, shape index: {}]
  %s13 = inlined_call_operand.vmem [shape: f32[96,1], index: 13, kind: input, shape index: {}]
  %s14 = inlined_call_operand.hbm [shape: f32[2,16,128], index: 14, kind: output, shape index: {}]
  %s15 = sld [smem:[#allocation0]]
  $region89: #{tpu_custom_call.1} parent=0
    _
  %s17 = ssub.s32 1, %s15
  %s18 = scalar_select 0, %s17, %s15
  $region1: #{tpu_custom_call.1} parent=0
    #allocation2 [shape = 'u8[16384]{0}', space=vmem, size = 0x4000, scoped, tag = 'output window, operand 0']
    #allocation3 [shape = 's32[2]{0}', space=sflag, size = 0x8, scoped, tag = 'scoped memory for tpu_custom_call.1']
    %19 = vsyncpa [#allocation3], 0
    %s20 = scalar_lea.sflag [#allocation3], 1
    %21 = vsyncpa %s20, 0
    loop: start=0, step=1, limit=4
    $region2: #{tpu_custom_call.1} parent=1 // loop_pre_header
      _
    $region3: #{tpu_custom_call.1} parent=1 // loop_header
      %s23 = sphi 0, %s27
      %p24 = scmp.ge.s32.totalorder %s23, 4
      %s33 = sphi 0, %s35
      %s36 = sphi 0, %s33
      %s37 = sphi 0, %s36
      %s53 = sphi 0, %s37
      %s59 = sphi 0, %s61
      %s62 = sphi 0, %s59
      %s63 = sphi 0, %s62
      %s79 = sphi 0, %s63
      %s85 = sphi 0, %s87
      %s88 = sphi 0, %s85
      %s89 = sphi 0, %s88
      %s105 = sphi 0, %s89
      %s111 = sphi 0, %s113
      %s114 = sphi 0, %s111
      %s115 = sphi 0, %s114
      %s131 = sphi 0, %s115
      %s135 = sphi 0, %s135
      %s137 = sphi 0, %s135
      %s138 = sphi 0, %s137
      %s152 = sphi 0, %s138
      %s156 = sphi 0, %s156
      %s158 = sphi 0, %s156
      %s159 = sphi 0, %s158
      %s173 = sphi 0, %s159
      %s177 = sphi 0, %s177
      %s179 = sphi 0, %s177
      %s180 = sphi 0, %s179
      %s194 = sphi 0, %s180
      %s198 = sphi 0, %s198
      %s200 = sphi 0, %s198
      %s201 = sphi 0, %s200
      %s215 = sphi 0, %s201
      %s219 = sphi 0, %s219
      %s221 = sphi 0, %s219
      %s222 = sphi 0, %s221
      %s236 = sphi 0, %s222
      %s240 = sphi 0, %s240
      %s242 = sphi 0, %s240
      %s243 = sphi 0, %s242
      %s257 = sphi 0, %s243
      %s261 = sphi 0, %s261
      %s263 = sphi 0, %s261
      %s264 = sphi 0, %s263
      %s278 = sphi 0, %s264
      %s282 = sphi 0, %s282
      %s284 = sphi 0, %s282
      %s285 = sphi 0, %s284
      %s299 = sphi 0, %s285
      %s303 = sphi 0, %s303
      %s305 = sphi 0, %s303
      %s306 = sphi 0, %s305
      %s320 = sphi 0, %s306
      %s324 = sphi 0, %s324
      %s326 = sphi 0, %s324
      %s327 = sphi 0, %s326
      %s341 = sphi 0, %s327
      %s347 = sphi 0, %s349
      %s350 = sphi 0, %s347
      %s351 = sphi 0, %s350
      %s367 = sphi 0, %s351
    $region4: #{tpu_custom_call.1} parent=1 // loop_header_branch
      %26 = sbr.rel (%p24) target = $region8
    $region5: #{tpu_custom_call.1} parent=1 // loop_body
      %s28 = ssub.s32 %s23, 1
      %s29 = ssub.s32 %s23, 2
      %s30 = sadd.s32 %s23, 1
      %s31 = ssub.s32 %s23, %s30
      %p32 = scmp.eq.s32.totalorder %s31, 0
      %s34 = sadd.s32 %s33, 1
      %s35 = scalar_select %p32, %s33, %s34
      %p38 = pneg %p32
      %p39 = scmp.eq.s32.totalorder %s23, 1
      %p40 = por %p38, %p39
      %p41 = scmp.ne.s32.totalorder %s33, %s36
      %p42 = scmp.eq.s32.totalorder %s23, 0
      %p43 = por %p41, %p42
      %p44 = scmp.ne.s32.totalorder %s33, %s36
      %p45 = scmp.eq.s32.totalorder %s28, 1
      %p46 = por %p44, %p45
      %p47 = scmp.ne.s32.totalorder %s36, %s37
      %p48 = scmp.eq.s32.totalorder %s28, 0
      %p49 = por %p47, %p48
      %p50 = scmp.ne.s32.totalorder %s36, %s37
      %p51 = scmp.eq.s32.totalorder %s29, 1
      %p52 = por %p50, %p51
      %p54 = scmp.ne.s32.totalorder %s37, %s53
      %p55 = scmp.eq.s32.totalorder %s29, 0
      %p56 = por %p54, %p55
      %s57 = ssub.s32 %s23, %s30
      %p58 = scmp.eq.s32.totalorder %s57, 0
      %s60 = sadd.s32 %s59, 1
      %s61 = scalar_select %p58, %s59, %s60
      %p64 = pneg %p58
      %p65 = scmp.eq.s32.totalorder %s23, 1
      %p66 = por %p64, %p65
      %p67 = scmp.ne.s32.totalorder %s59, %s62
      %p68 = scmp.eq.s32.totalorder %s23, 0
      %p69 = por %p67, %p68
      %p70 = scmp.ne.s32.totalorder %s59, %s62
      %p71 = scmp.eq.s32.totalorder %s28, 1
      %p72 = por %p70, %p71
      %p73 = scmp.ne.s32.totalorder %s62, %s63
      %p74 = scmp.eq.s32.totalorder %s28, 0
      %p75 = por %p73, %p74
      %p76 = scmp.ne.s32.totalorder %s62, %s63
      %p77 = scmp.eq.s32.totalorder %s29, 1
      %p78 = por %p76, %p77
      %p80 = scmp.ne.s32.totalorder %s63, %s79
      %p81 = scmp.eq.s32.totalorder %s29, 0
      %p82 = por %p80, %p81
      %s83 = ssub.s32 %s23, %s30
      %p84 = scmp.eq.s32.totalorder %s83, 0
      %s86 = sadd.s32 %s85, 1
      %s87 = scalar_select %p84, %s85, %s86
      %p90 = pneg %p84
      %p91 = scmp.eq.s32.totalorder %s23, 1
      %p92 = por %p90, %p91
      %p93 = scmp.ne.s32.totalorder %s85, %s88
      %p94 = scmp.eq.s32.totalorder %s23, 0
      %p95 = por %p93, %p94
      %p96 = scmp.ne.s32.totalorder %s85, %s88
      %p97 = scmp.eq.s32.totalorder %s28, 1
      %p98 = por %p96, %p97
      %p99 = scmp.ne.s32.totalorder %s88, %s89
      %p100 = scmp.eq.s32.totalorder %s28, 0
      %p101 = por %p99, %p100
      %p102 = scmp.ne.s32.totalorder %s88, %s89
      %p103 = scmp.eq.s32.totalorder %s29, 1
      %p104 = por %p102, %p103
      %p106 = scmp.ne.s32.totalorder %s89, %s105
      %p107 = scmp.eq.s32.totalorder %s29, 0
      %p108 = por %p106, %p107
      %s109 = ssub.s32 %s23, %s30
      %p110 = scmp.eq.s32.totalorder %s109, 0
      %s112 = sadd.s32 %s111, 1
      %s113 = scalar_select %p110, %s111, %s112
      %p116 = pneg %p110
      %p117 = scmp.eq.s32.totalorder %s23, 1
      %p118 = por %p116, %p117
      %p119 = scmp.ne.s32.totalorder %s111, %s114
      %p120 = scmp.eq.s32.totalorder %s23, 0
      %p121 = por %p119, %p120
      %p122 = scmp.ne.s32.totalorder %s111, %s114
      %p123 = scmp.eq.s32.totalorder %s28, 1
      %p124 = por %p122, %p123
      %p125 = scmp.ne.s32.totalorder %s114, %s115
      %p126 = scmp.eq.s32.totalorder %s28, 0
      %p127 = por %p125, %p126
      %p128 = scmp.ne.s32.totalorder %s114, %s115
      %p129 = scmp.eq.s32.totalorder %s29, 1
      %p130 = por %p128, %p129
      %p132 = scmp.ne.s32.totalorder %s115, %s131
      %p133 = scmp.eq.s32.totalorder %s29, 0
      %p134 = por %p132, %p133
      %s136 = sadd.s32 %s135, 1
      %p139 = scmp.eq.s32.totalorder %s23, 1
      %p140 = scmp.ne.s32.totalorder %s135, %s137
      %p141 = scmp.eq.s32.totalorder %s23, 0
      %p142 = por %p140, %p141
      %p143 = scmp.ne.s32.totalorder %s135, %s137
      %p144 = scmp.eq.s32.totalorder %s28, 1
      %p145 = por %p143, %p144
      %p146 = scmp.ne.s32.totalorder %s137, %s138
      %p147 = scmp.eq.s32.totalorder %s28, 0
      %p148 = por %p146, %p147
      %p149 = scmp.ne.s32.totalorder %s137, %s138
      %p150 = scmp.eq.s32.totalorder %s29, 1
      %p151 = por %p149, %p150
      %p153 = scmp.ne.s32.totalorder %s138, %s152
      %p154 = scmp.eq.s32.totalorder %s29, 0
      %p155 = por %p153, %p154
      %s157 = sadd.s32 %s156, 1
      %p160 = scmp.eq.s32.totalorder %s23, 1
      %p161 = scmp.ne.s32.totalorder %s156, %s158
      %p162 = scmp.eq.s32.totalorder %s23, 0
      %p163 = por %p161, %p162
      %p164 = scmp.ne.s32.totalorder %s156, %s158
      %p165 = scmp.eq.s32.totalorder %s28, 1
      %p166 = por %p164, %p165
      %p167 = scmp.ne.s32.totalorder %s158, %s159
      %p168 = scmp.eq.s32.totalorder %s28, 0
      %p169 = por %p167, %p168
      %p170 = scmp.ne.s32.totalorder %s158, %s159
      %p171 = scmp.eq.s32.totalorder %s29, 1
      %p172 = por %p170, %p171
      %p174 = scmp.ne.s32.totalorder %s159, %s173
      %p175 = scmp.eq.s32.totalorder %s29, 0
      %p176 = por %p174, %p175
      %s178 = sadd.s32 %s177, 1
      %p181 = scmp.eq.s32.totalorder %s23, 1
      %p182 = scmp.ne.s32.totalorder %s177, %s179
      %p183 = scmp.eq.s32.totalorder %s23, 0
      %p184 = por %p182, %p183
      %p185 = scmp.ne.s32.totalorder %s177, %s179
      %p186 = scmp.eq.s32.totalorder %s28, 1
      %p187 = por %p185, %p186
      %p188 = scmp.ne.s32.totalorder %s179, %s180
      %p189 = scmp.eq.s32.totalorder %s28, 0
      %p190 = por %p188, %p189
      %p191 = scmp.ne.s32.totalorder %s179, %s180
      %p192 = scmp.eq.s32.totalorder %s29, 1
      %p193 = por %p191, %p192
      %p195 = scmp.ne.s32.totalorder %s180, %s194
      %p196 = scmp.eq.s32.totalorder %s29, 0
      %p197 = por %p195, %p196
      %s199 = sadd.s32 %s198, 1
      %p202 = scmp.eq.s32.totalorder %s23, 1
      %p203 = scmp.ne.s32.totalorder %s198, %s200
      %p204 = scmp.eq.s32.totalorder %s23, 0
      %p205 = por %p203, %p204
      %p206 = scmp.ne.s32.totalorder %s198, %s200
      %p207 = scmp.eq.s32.totalorder %s28, 1
      %p208 = por %p206, %p207
      %p209 = scmp.ne.s32.totalorder %s200, %s201
      %p210 = scmp.eq.s32.totalorder %s28, 0
      %p211 = por %p209, %p210
      %p212 = scmp.ne.s32.totalorder %s200, %s201
      %p213 = scmp.eq.s32.totalorder %s29, 1
      %p214 = por %p212, %p213
      %p216 = scmp.ne.s32.totalorder %s201, %s215
      %p217 = scmp.eq.s32.totalorder %s29, 0
      %p218 = por %p216, %p217
      %s220 = sadd.s32 %s219, 1
      %p223 = scmp.eq.s32.totalorder %s23, 1
      %p224 = scmp.ne.s32.totalorder %s219, %s221
      %p225 = scmp.eq.s32.totalorder %s23, 0
      %p226 = por %p224, %p225
      %p227 = scmp.ne.s32.totalorder %s219, %s221
      %p228 = scmp.eq.s32.totalorder %s28, 1
      %p229 = por %p227, %p228
      %p230 = scmp.ne.s32.totalorder %s221, %s222
      %p231 = scmp.eq.s32.totalorder %s28, 0
      %p232 = por %p230, %p231
      %p233 = scmp.ne.s32.totalorder %s221, %s222
      %p234 = scmp.eq.s32.totalorder %s29, 1
      %p235 = por %p233, %p234
      %p237 = scmp.ne.s32.totalorder %s222, %s236
      %p238 = scmp.eq.s32.totalorder %s29, 0
      %p239 = por %p237, %p238
      %s241 = sadd.s32 %s240, 1
      %p244 = scmp.eq.s32.totalorder %s23, 1
      %p245 = scmp.ne.s32.totalorder %s240, %s242
      %p246 = scmp.eq.s32.totalorder %s23, 0
      %p247 = por %p245, %p246
      %p248 = scmp.ne.s32.totalorder %s240, %s242
      %p249 = scmp.eq.s32.totalorder %s28, 1
      %p250 = por %p248, %p249
      %p251 = scmp.ne.s32.totalorder %s242, %s243
      %p252 = scmp.eq.s32.totalorder %s28, 0
      %p253 = por %p251, %p252
      %p254 = scmp.ne.s32.totalorder %s242, %s243
      %p255 = scmp.eq.s32.totalorder %s29, 1
      %p256 = por %p254, %p255
      %p258 = scmp.ne.s32.totalorder %s243, %s257
      %p259 = scmp.eq.s32.totalorder %s29, 0
      %p260 = por %p258, %p259
      %s262 = sadd.s32 %s261, 1
      %p265 = scmp.eq.s32.totalorder %s23, 1
      %p266 = scmp.ne.s32.totalorder %s261, %s263
      %p267 = scmp.eq.s32.totalorder %s23, 0
      %p268 = por %p266, %p267
      %p269 = scmp.ne.s32.totalorder %s261, %s263
      %p270 = scmp.eq.s32.totalorder %s28, 1
      %p271 = por %p269, %p270
      %p272 = scmp.ne.s32.totalorder %s263, %s264
      %p273 = scmp.eq.s32.totalorder %s28, 0
      %p274 = por %p272, %p273
      %p275 = scmp.ne.s32.totalorder %s263, %s264
      %p276 = scmp.eq.s32.totalorder %s29, 1
      %p277 = por %p275, %p276
      %p279 = scmp.ne.s32.totalorder %s264, %s278
      %p280 = scmp.eq.s32.totalorder %s29, 0
      %p281 = por %p279, %p280
      %s283 = sadd.s32 %s282, 1
      %p286 = scmp.eq.s32.totalorder %s23, 1
      %p287 = scmp.ne.s32.totalorder %s282, %s284
      %p288 = scmp.eq.s32.totalorder %s23, 0
      %p289 = por %p287, %p288
      %p290 = scmp.ne.s32.totalorder %s282, %s284
      %p291 = scmp.eq.s32.totalorder %s28, 1
      %p292 = por %p290, %p291
      %p293 = scmp.ne.s32.totalorder %s284, %s285
      %p294 = scmp.eq.s32.totalorder %s28, 0
      %p295 = por %p293, %p294
      %p296 = scmp.ne.s32.totalorder %s284, %s285
      %p297 = scmp.eq.s32.totalorder %s29, 1
      %p298 = por %p296, %p297
      %p300 = scmp.ne.s32.totalorder %s285, %s299
      %p301 = scmp.eq.s32.totalorder %s29, 0
      %p302 = por %p300, %p301
      %s304 = sadd.s32 %s303, 1
      %p307 = scmp.eq.s32.totalorder %s23, 1
      %p308 = scmp.ne.s32.totalorder %s303, %s305
      %p309 = scmp.eq.s32.totalorder %s23, 0
      %p310 = por %p308, %p309
      %p311 = scmp.ne.s32.totalorder %s303, %s305
      %p312 = scmp.eq.s32.totalorder %s28, 1
      %p313 = por %p311, %p312
      %p314 = scmp.ne.s32.totalorder %s305, %s306
      %p315 = scmp.eq.s32.totalorder %s28, 0
      %p316 = por %p314, %p315
      %p317 = scmp.ne.s32.totalorder %s305, %s306
      %p318 = scmp.eq.s32.totalorder %s29, 1
      %p319 = por %p317, %p318
      %p321 = scmp.ne.s32.totalorder %s306, %s320
      %p322 = scmp.eq.s32.totalorder %s29, 0
      %p323 = por %p321, %p322
      %s325 = sadd.s32 %s324, 1
      %p328 = scmp.eq.s32.totalorder %s23, 1
      %p329 = scmp.ne.s32.totalorder %s324, %s326
      %p330 = scmp.eq.s32.totalorder %s23, 0
      %p331 = por %p329, %p330
      %p332 = scmp.ne.s32.totalorder %s324, %s326
      %p333 = scmp.eq.s32.totalorder %s28, 1
      %p334 = por %p332, %p333
      %p335 = scmp.ne.s32.totalorder %s326, %s327
      %p336 = scmp.eq.s32.totalorder %s28, 0
      %p337 = por %p335, %p336
      %p338 = scmp.ne.s32.totalorder %s326, %s327
      %p339 = scmp.eq.s32.totalorder %s29, 1
      %p340 = por %p338, %p339
      %p342 = scmp.ne.s32.totalorder %s327, %s341
      %p343 = scmp.eq.s32.totalorder %s29, 0
      %p344 = por %p342, %p343
      %s345 = ssub.s32 %s23, %s30
      %p346 = scmp.eq.s32.totalorder %s345, 0
      %s348 = sadd.s32 %s347, 1
      %s349 = scalar_select %p346, %s347, %s348
      %p352 = pneg %p346
      %p353 = scmp.eq.s32.totalorder %s23, 1
      %p354 = por %p352, %p353
      %p355 = scmp.ne.s32.totalorder %s347, %s350
      %p356 = scmp.eq.s32.totalorder %s23, 0
      %p357 = por %p355, %p356
      %p358 = scmp.ne.s32.totalorder %s347, %s350
      %p359 = scmp.eq.s32.totalorder %s28, 1
      %p360 = por %p358, %p359
      %p361 = scmp.ne.s32.totalorder %s350, %s351
      %p362 = scmp.eq.s32.totalorder %s28, 0
      %p363 = por %p361, %p362
      %p364 = scmp.ne.s32.totalorder %s350, %s351
      %p365 = scmp.eq.s32.totalorder %s29, 1
      %p366 = por %p364, %p365
      %p368 = scmp.ne.s32.totalorder %s351, %s367
      %p369 = scmp.eq.s32.totalorder %s29, 0
      %p370 = por %p368, %p369
      %p371 = scmp.le.s32.totalorder 1, %s23
      %p372 = scmp.lt.s32.totalorder %s23, 3
      %p373 = pnand %p371, %p372
      %p374 = pneg %p373
      // Predicated region
      $region9: #{tpu_custom_call.1} parent=5 // pred_check
        _
      $region10: #{tpu_custom_call.1} parent=5 // pred_check_branch
        %376 = sbr.rel (%p373) target = $region12
      $region11: #{tpu_custom_call.1} parent=5 // pred_region
        %s377 = ssub.s32 %s23, 1
        // Predicated region
        $region13: #{tpu_custom_call.1} parent=11 // pred_check
          %p378 = pneg %p148
        $region14: #{tpu_custom_call.1} parent=11 // pred_check_branch
          %380 = sbr.rel (%p378) target = $region16
        $region15: #{tpu_custom_call.1} parent=11 // pred_region
          _
        $region16: #{tpu_custom_call.1} parent=11 // pred_fallthru
          _
        // Predicated region
        $region17: #{tpu_custom_call.1} parent=11 // pred_check
          %p381 = pneg %p169
        $region18: #{tpu_custom_call.1} parent=11 // pred_check_branch
          %383 = sbr.rel (%p381) target = $region20
        $region19: #{tpu_custom_call.1} parent=11 // pred_region
          _
        $region20: #{tpu_custom_call.1} parent=11 // pred_fallthru
          _
        // Predicated region
        $region21: #{tpu_custom_call.1} parent=11 // pred_check
          %p384 = pneg %p190
        $region22: #{tpu_custom_call.1} parent=11 // pred_check_branch
          %386 = sbr.rel (%p384) target = $region24
        $region23: #{tpu_custom_call.1} parent=11 // pred_region
          _
        $region24: #{tpu_custom_call.1} parent=11 // pred_fallthru
          _
        // Predicated region
        $region25: #{tpu_custom_call.1} parent=11 // pred_check
          %p387 = pneg %p211
        $region26: #{tpu_custom_call.1} parent=11 // pred_check_branch
          %389 = sbr.rel (%p387) target = $region28
        $region27: #{tpu_custom_call.1} parent=11 // pred_region
          _
        $region28: #{tpu_custom_call.1} parent=11 // pred_fallthru
          _
        // Predicated region
        $region29: #{tpu_custom_call.1} parent=11 // pred_check
          %p390 = pneg %p232
        $region30: #{tpu_custom_call.1} parent=11 // pred_check_branch
          %392 = sbr.rel (%p390) target = $region32
        $region31: #{tpu_custom_call.1} parent=11 // pred_region
          _
        $region32: #{tpu_custom_call.1} parent=11 // pred_fallthru
          _
        // Predicated region
        $region33: #{tpu_custom_call.1} parent=11 // pred_check
          %p393 = pneg %p253
        $region34: #{tpu_custom_call.1} parent=11 // pred_check_branch
          %395 = sbr.rel (%p393) target = $region36
        $region35: #{tpu_custom_call.1} parent=11 // pred_region
          _
        $region36: #{tpu_custom_call.1} parent=11 // pred_fallthru
          _
        // Predicated region
        $region37: #{tpu_custom_call.1} parent=11 // pred_check
          %p396 = pneg %p274
        $region38: #{tpu_custom_call.1} parent=11 // pred_check_branch
          %398 = sbr.rel (%p396) target = $region40
        $region39: #{tpu_custom_call.1} parent=11 // pred_region
          _
        $region40: #{tpu_custom_call.1} parent=11 // pred_fallthru
          _
        // Predicated region
        $region41: #{tpu_custom_call.1} parent=11 // pred_check
          %p399 = pneg %p295
        $region42: #{tpu_custom_call.1} parent=11 // pred_check_branch
          %401 = sbr.rel (%p399) target = $region44
        $region43: #{tpu_custom_call.1} parent=11 // pred_region
          _
        $region44: #{tpu_custom_call.1} parent=11 // pred_fallthru
          _
        // Predicated region
        $region45: #{tpu_custom_call.1} parent=11 // pred_check
          %p402 = pneg %p316
        $region46: #{tpu_custom_call.1} parent=11 // pred_check_branch
          %404 = sbr.rel (%p402) target = $region48
        $region47: #{tpu_custom_call.1} parent=11 // pred_region
          _
        $region48: #{tpu_custom_call.1} parent=11 // pred_fallthru
          _
        // Predicated region
        $region49: #{tpu_custom_call.1} parent=11 // pred_check
          %p405 = pneg %p337
        $region50: #{tpu_custom_call.1} parent=11 // pred_check_branch
          %407 = sbr.rel (%p405) target = $region52
        $region51: #{tpu_custom_call.1} parent=11 // pred_region
          _
        $region52: #{tpu_custom_call.1} parent=11 // pred_fallthru
          _
      $region12: #{tpu_custom_call.1} parent=5 // pred_fallthru
        _
      %p408 = scmp.lt.s32.totalorder %s23, 2
      // Predicated region
      $region53: #{tpu_custom_call.1} parent=5 // pred_check
        %p409 = pneg %p408
      $region54: #{tpu_custom_call.1} parent=5 // pred_check_branch
        %411 = sbr.rel (%p409) target = $region56
      $region55: #{tpu_custom_call.1} parent=5 // pred_region
        // Predicated region
        $region57: #{tpu_custom_call.1} parent=55 // pred_check
          %p412 = pneg %p43
        $region58: #{tpu_custom_call.1} parent=55 // pred_check_branch
          %414 = sbr.rel (%p412) target = $region60
        $region59: #{tpu_custom_call.1} parent=55 // pred_region
          %p415 = scmp.lt.s32.totalorder %s23, 1
          %s416 = scalar_select %p415, %s23, 1
          %s417 = smul.addr %s416, 2
          %s418 = smul.addr %s417, 8
          %s419 = scalar_lea.vmem %s0, %s418
        $region60: #{tpu_custom_call.1} parent=55 // pred_fallthru
          _
        // Predicated region
        $region61: #{tpu_custom_call.1} parent=55 // pred_check
          %p420 = pneg %p69
        $region62: #{tpu_custom_call.1} parent=55 // pred_check_branch
          %422 = sbr.rel (%p420) target = $region64
        $region63: #{tpu_custom_call.1} parent=55 // pred_region
          %p423 = scmp.lt.s32.totalorder %s23, 1
          %s424 = scalar_select %p423, %s23, 1
          %s425 = smul.addr %s424, 3
          %s426 = smul.addr %s425, 8
          %s427 = scalar_lea.vmem %s1, %s426
        $region64: #{tpu_custom_call.1} parent=55 // pred_fallthru
          _
        // Predicated region
        $region65: #{tpu_custom_call.1} parent=55 // pred_check
          %p428 = pneg %p95
        $region66: #{tpu_custom_call.1} parent=55 // pred_check_branch
          %430 = sbr.rel (%p428) target = $region68
        $region67: #{tpu_custom_call.1} parent=55 // pred_region
          %p431 = scmp.lt.s32.totalorder %s23, 1
          %s432 = scalar_select %p431, %s23, 1
          %s433 = smul.addr %s432, 4
          %s434 = smul.addr %s433, 8
          %s435 = scalar_lea.vmem %s2, %s434
        $region68: #{tpu_custom_call.1} parent=55 // pred_fallthru
          _
        // Predicated region
        $region69: #{tpu_custom_call.1} parent=55 // pred_check
          %p436 = pneg %p121
        $region70: #{tpu_custom_call.1} parent=55 // pred_check_branch
          %438 = sbr.rel (%p436) target = $region72
        $region71: #{tpu_custom_call.1} parent=55 // pred_region
          %p439 = scmp.lt.s32.totalorder %s23, 1
          %s440 = scalar_select %p439, %s23, 1
          %s441 = smul.addr %s440, 6
          %s442 = smul.addr %s441, 8
          %s443 = scalar_lea.vmem %s3, %s442
        $region72: #{tpu_custom_call.1} parent=55 // pred_fallthru
          _
      $region56: #{tpu_custom_call.1} parent=5 // pred_fallthru
        _
      %p444 = scmp.le.s32.totalorder 1, %s23
      %p445 = scmp.lt.s32.totalorder %s23, 3
      %p446 = pnand %p444, %p445
      %p447 = pneg %p446
      // Predicated region
      $region73: #{tpu_custom_call.1} parent=5 // pred_check
        _
      $region74: #{tpu_custom_call.1} parent=5 // pred_check_branch
        %449 = sbr.rel (%p446) target = $region76
      $region75: #{tpu_custom_call.1} parent=5 // pred_region
        %s450 = ssub.s32 %s23, 1
        %p451 = scmp.lt.s32.totalorder %s28, 1
        %s452 = scalar_select %p451, %s28, 1
        %s453 = smul.addr %s452, 2
        %s454 = smul.addr %s453, 8
        %s455 = scalar_lea.vmem %s0, %s454
        %p456 = pneg %p49
        %p457 = pneg %p46
        %p458 = scmp.lt.s32.totalorder %s28, 1
        %s459 = scalar_select %p458, %s28, 1
        %s460 = smul.addr %s459, 3
        %s461 = smul.addr %s460, 8
        %s462 = scalar_lea.vmem %s1, %s461
        %p463 = pneg %p75
        %p464 = pneg %p72
        %p465 = scmp.lt.s32.totalorder %s28, 1
        %s466 = scalar_select %p465, %s28, 1
        %s467 = smul.addr %s466, 4
        %s468 = smul.addr %s467, 8
        %s469 = scalar_lea.vmem %s2, %s468
        %p470 = pneg %p101
        %p471 = pneg %p98
        %p472 = scmp.lt.s32.totalorder %s28, 1
        %s473 = scalar_select %p472, %s28, 1
        %s474 = smul.addr %s473, 6
        %s475 = smul.addr %s474, 8
        %s476 = scalar_lea.vmem %s3, %s475
        %p477 = pneg %p127
        %p478 = pneg %p124
        %p479 = pneg %p148
        %p480 = pneg %p145
        %p481 = pneg %p169
        %p482 = pneg %p166
        %p483 = pneg %p190
        %p484 = pneg %p187
        %p485 = pneg %p211
        %p486 = pneg %p208
        %p487 = pneg %p232
        %p488 = pneg %p229
        %p489 = pneg %p253
        %p490 = pneg %p250
        %p491 = pneg %p274
        %p492 = pneg %p271
        %p493 = pneg %p295
        %p494 = pneg %p292
        %p495 = pneg %p316
        %p496 = pneg %p313
        %p497 = pneg %p337
        %p498 = pneg %p334
        %p499 = pneg %p363
        %p500 = pneg %p360
        %s501 = sand.u32 %s350, 1
        %s502 = scalar_lea.sflag [#allocation3], %s501
        %s503 = sand.u32 %s350, 1
        %s504 = smul.addr %s503, 16
        %s505 = scalar_lea.vmem [#allocation2], %s504
        %p506 = scmp.lt.s32.totalorder %s28, 1
        %s507 = scalar_select %p506, %s28, 1
        %s508 = smul.addr %s507, 2
        %s509 = smul.addr %s508, 8
        %s510 = scalar_lea.vmem %s0, %s509
        %p511 = scmp.lt.s32.totalorder %s28, 1
        %s512 = scalar_select %p511, %s28, 1
        %s513 = smul.addr %s512, 3
        %s514 = smul.addr %s513, 8
        %s515 = scalar_lea.vmem %s1, %s514
        %p516 = scmp.lt.s32.totalorder %s28, 1
        %s517 = scalar_select %p516, %s28, 1
        %s518 = smul.addr %s517, 4
        %s519 = smul.addr %s518, 8
        %s520 = scalar_lea.vmem %s2, %s519
        %p521 = scmp.lt.s32.totalorder %s28, 1
        %s522 = scalar_select %p521, %s28, 1
        %s523 = smul.addr %s522, 6
        %s524 = smul.addr %s523, 8
        %s525 = scalar_lea.vmem %s3, %s524
        %v526 = vld [vmem:[%s8] sm:$0xff]
        %v527 = vld [vmem:[%s8 + $0x8] sm:$0xff]
        %v528 = vld [vmem:[%s8 + $0x10] sm:$0xff]
        %v529 = vld [vmem:[%s8 + $0x18] sm:$0xff]
        %v530 = vld [vmem:[%s7] sm:$0xff]
        %v531 = vld [vmem:[%s7 + $0x8] sm:$0xff]
        %v532 = vld [vmem:[%s7 + $0x10] sm:$0xff]
        %v533 = vld [vmem:[%s7 + $0x18] sm:$0xff]
        %v534 = vld [vmem:[%s525] sm:$0xff]
        %v535 = vld [vmem:[%s525 + $0x8] sm:$0xff]
        %v536 = vld [vmem:[%s525 + $0x10] sm:$0xff]
        %v537 = vld [vmem:[%s525 + $0x18] sm:$0xff]
        %v538 = vld [vmem:[%s525 + $0x20] sm:$0xff]
        %v539 = vld [vmem:[%s525 + $0x28] sm:$0xff]
        %541 = vset.pattern.permute.xlu0 3
        %542 = vperm.xlu0 %541, %v526
        %v543 = vpop.permute.xlu0 %542
        %546 = vset.pattern.permute.xlu0 3
        %547 = vperm.xlu0 %546, %v527
        %v548 = vpop.permute.xlu0 %547
        %551 = vset.pattern.permute.xlu0 3
        %552 = vperm.xlu0 %551, %v528
        %v553 = vpop.permute.xlu0 %552
        %556 = vset.pattern.permute.xlu0 3
        %557 = vperm.xlu0 %556, %v529
        %v558 = vpop.permute.xlu0 %557
        %vm560 = vcmask 392192
        %v562 = vsel %vm560, %v530, 0
        %v565 = vsel %vm560, %v531, 0
        %v568 = vsel %vm560, %v532, 0
        %v571 = vsel %vm560, %v533, 0
        %573 = vmatprep.subr.mxu0 0.0
        %574 = vmatpush1.msra.mxu0 %v534
        %575 = vmatprep.subr.mxu0 0.0
        %576 = vmatpush1.msra.mxu0 %v535
        %577 = vmatprep.subr.mxu0 0.0
        %578 = vmatpush1.msra.mxu0 %v536
        %579 = vmatprep.subr.mxu0 0.0
        %580 = vmatpush1.msra.mxu0 %v537
        %581 = vmatprep.subr.mxu0 0.0
        %582 = vmatpush1.msra.mxu0 %v538
        %583 = vmatprep.subr.mxu0 0.0
        %584 = vmatpush1.msra.mxu0 %v539
        %585 = vmatprep.subr.mxu0 0.0
        %586 = vmatpush1.msra.mxu0 0.0
        %587 = vmatprep.subr.mxu0 0.0
        %588 = vmatpush1.msra.mxu0 0.0
        %589 = vmatprep.subr.mxu0 0.0
        %590 = vmatpush1.msra.mxu0 0.0
        %591 = vmatprep.subr.mxu0 0.0
        %592 = vmatpush1.msra.mxu0 0.0
        %593 = vmatprep.subr.mxu0 0.0
        %594 = vmatpush1.msra.mxu0 0.0
        %595 = vmatprep.subr.mxu0 0.0
        %596 = vmatpush1.msra.mxu0 0.0
        %597 = vmatprep.subr.mxu0 0.0
        %598 = vmatpush1.msra.mxu0 0.0
        %599 = vmatprep.subr.mxu0 0.0
        %600 = vmatpush1.msra.mxu0 0.0
        %601 = vmatprep.subr.mxu0 0.0
        %602 = vmatpush1.msra.mxu0 0.0
        %603 = vmatprep.subr.mxu0 0.0
        %604 = vmatpush1.msra.mxu0 0.0
        %605 = vmatprep.subr.mxu0 0.0
        %606 = vmatpush1.msra.mxu0 0.0
        %607 = vmatprep.subr.mxu0 0.0
        %608 = vmatpush1.msra.mxu0 0.0
        %609 = vmatprep.subr.mxu0 0.0
        %610 = vmatpush1.msra.mxu0 0.0
        %611 = vmatprep.subr.mxu0 0.0
        %612 = vmatpush1.msra.mxu0 0.0
        %613 = vmatprep.subr.mxu0 0.0
        %614 = vmatpush1.msra.mxu0 0.0
        %615 = vmatprep.subr.mxu0 0.0
        %616 = vmatpush1.msra.mxu0 0.0
        %617 = vmatprep.subr.mxu0 0.0
        %618 = vmatpush1.msra.mxu0 0.0
        %619 = vmatprep.subr.mxu0 0.0
        %620 = vmatpush1.msra.mxu0 0.0
        %621 = vmatprep.subr.mxu0 0.0
        %622 = vmatpush1.msra.mxu0 0.0
        %623 = vmatprep.subr.mxu0 0.0
        %624 = vmatpush1.msra.mxu0 0.0
        %625 = vmatprep.subr.mxu0 0.0
        %626 = vmatpush1.msra.mxu0 0.0
        %627 = vmatprep.subr.mxu0 0.0
        %628 = vmatpush1.msra.mxu0 0.0
        %629 = vmatprep.subr.mxu0 0.0
        %630 = vmatpush1.msra.mxu0 0.0
        %631 = vmatprep.subr.mxu0 0.0
        %632 = vmatpush1.msra.mxu0 0.0
        %633 = vmatprep.subr.mxu0 0.0
        %634 = vmatpush1.msra.mxu0 0.0
        %635 = vmatprep.subr.mxu0 0.0
        %636 = vmatpush1.msra.mxu0 0.0
        %637 = vmatprep.mubr.f32.mxu0 0.0
        %638 = vmatmul.mubr.f32.gmra.mrb[0].mxu0 %v562
        %v639 = vpop.f32.mrb[0].mxu0
        %v640 = vadd.f32 %v543, %v639
        %v641 = vpop.f32.mrb[0].mxu0
        %642 = vmatprep.mubr.f32.mxu0 0.0
        %643 = vmatmul.mubr.f32.gmra.mrb[0].mxu0 %v565
        %v644 = vpop.f32.mrb[0].mxu0
        %v645 = vadd.f32 %v548, %v644
        %v646 = vpop.f32.mrb[0].mxu0
        %647 = vmatprep.mubr.f32.mxu0 0.0
        %648 = vmatmul.mubr.f32.gmra.mrb[0].mxu0 %v568
        %v649 = vpop.f32.mrb[0].mxu0
        %v650 = vadd.f32 %v553, %v649
        %v651 = vpop.f32.mrb[0].mxu0
        %652 = vmatprep.mubr.f32.mxu0 0.0
        %653 = vmatmul.mubr.f32.gmra.mrb[0].mxu0 %v571
        %v654 = vpop.f32.mrb[0].mxu0
        %v655 = vadd.f32 %v558, %v654
        %v656 = vpop.f32.mrb[0].mxu0
        %657 = vdwg.mxu0
        %v658 = vld [vmem:[%s6] sm:$0xff]
        %v659 = vld [vmem:[%s6 + $0x8] sm:$0xff]
        %v660 = vld [vmem:[%s6 + $0x10] sm:$0xff]
        %v661 = vld [vmem:[%s6 + $0x18] sm:$0xff]
        %v662 = vld [vmem:[%s520] sm:$0xff]
        %v663 = vld [vmem:[%s520 + $0x8] sm:$0xff]
        %v664 = vld [vmem:[%s520 + $0x10] sm:$0xff]
        %v665 = vld [vmem:[%s520 + $0x18] sm:$0xff]
        %666 = vset.pattern.permute.xlu0 2
        %667 = vperm.xlu0 %666, %v526
        %v668 = vpop.permute.xlu0 %667
        %670 = vset.pattern.permute.xlu0 2
        %671 = vperm.xlu0 %670, %v527
        %v672 = vpop.permute.xlu0 %671
        %674 = vset.pattern.permute.xlu0 2
        %675 = vperm.xlu0 %674, %v528
        %v676 = vpop.permute.xlu0 %675
        %678 = vset.pattern.permute.xlu0 2
        %679 = vperm.xlu0 %678, %v529
        %v680 = vpop.permute.xlu0 %679
        %vm682 = vcmask 261120
        %v684 = vsel %vm682, %v658, 0
        %v687 = vsel %vm682, %v659, 0
        %v690 = vsel %vm682, %v660, 0
        %v693 = vsel %vm682, %v661, 0
        %695 = vmatprep.subr.mxu0 0.0
        %696 = vmatpush1.msra.mxu0 %v662
        %697 = vmatprep.subr.mxu0 0.0
        %698 = vmatpush1.msra.mxu0 %v663
        %699 = vmatprep.subr.mxu0 0.0
        %700 = vmatpush1.msra.mxu0 %v664
        %701 = vmatprep.subr.mxu0 0.0
        %702 = vmatpush1.msra.mxu0 %v665
        %703 = vmatprep.subr.mxu0 0.0
        %704 = vmatpush1.msra.mxu0 0.0
        %705 = vmatprep.subr.mxu0 0.0
        %706 = vmatpush1.msra.mxu0 0.0
        %707 = vmatprep.subr.mxu0 0.0
        %708 = vmatpush1.msra.mxu0 0.0
        %709 = vmatprep.subr.mxu0 0.0
        %710 = vmatpush1.msra.mxu0 0.0
        %711 = vmatprep.subr.mxu0 0.0
        %712 = vmatpush1.msra.mxu0 0.0
        %713 = vmatprep.subr.mxu0 0.0
        %714 = vmatpush1.msra.mxu0 0.0
        %715 = vmatprep.subr.mxu0 0.0
        %716 = vmatpush1.msra.mxu0 0.0
        %717 = vmatprep.subr.mxu0 0.0
        %718 = vmatpush1.msra.mxu0 0.0
        %719 = vmatprep.subr.mxu0 0.0
        %720 = vmatpush1.msra.mxu0 0.0
        %721 = vmatprep.subr.mxu0 0.0
        %722 = vmatpush1.msra.mxu0 0.0
        %723 = vmatprep.subr.mxu0 0.0
        %724 = vmatpush1.msra.mxu0 0.0
        %725 = vmatprep.subr.mxu0 0.0
        %726 = vmatpush1.msra.mxu0 0.0
        %727 = vmatprep.subr.mxu0 0.0
        %728 = vmatpush1.msra.mxu0 0.0
        %729 = vmatprep.subr.mxu0 0.0
        %730 = vmatpush1.msra.mxu0 0.0
        %731 = vmatprep.subr.mxu0 0.0
        %732 = vmatpush1.msra.mxu0 0.0
        %733 = vmatprep.subr.mxu0 0.0
        %734 = vmatpush1.msra.mxu0 0.0
        %735 = vmatprep.subr.mxu0 0.0
        %736 = vmatpush1.msra.mxu0 0.0
        %737 = vmatprep.subr.mxu0 0.0
        %738 = vmatpush1.msra.mxu0 0.0
        %739 = vmatprep.subr.mxu0 0.0
        %740 = vmatpush1.msra.mxu0 0.0
        %741 = vmatprep.subr.mxu0 0.0
        %742 = vmatpush1.msra.mxu0 0.0
        %743 = vmatprep.subr.mxu0 0.0
        %744 = vmatpush1.msra.mxu0 0.0
        %745 = vmatprep.subr.mxu0 0.0
        %746 = vmatpush1.msra.mxu0 0.0
        %747 = vmatprep.subr.mxu0 0.0
        %748 = vmatpush1.msra.mxu0 0.0
        %749 = vmatprep.subr.mxu0 0.0
        %750 = vmatpush1.msra.mxu0 0.0
        %751 = vmatprep.subr.mxu0 0.0
        %752 = vmatpush1.msra.mxu0 0.0
        %753 = vmatprep.subr.mxu0 0.0
        %754 = vmatpush1.msra.mxu0 0.0
        %755 = vmatprep.subr.mxu0 0.0
        %756 = vmatpush1.msra.mxu0 0.0
        %757 = vmatprep.subr.mxu0 0.0
        %758 = vmatpush1.msra.mxu0 0.0
        %759 = vmatprep.mubr.f32.mxu0 0.0
        %760 = vmatmul.mubr.f32.gmra.mrb[0].mxu0 %v684
        %v761 = vpop.f32.mrb[0].mxu0
        %v762 = vadd.f32 %v668, %v761
        %v763 = vpop.f32.mrb[0].mxu0
        %764 = vmatprep.mubr.f32.mxu0 0.0
        %765 = vmatmul.mubr.f32.gmra.mrb[0].mxu0 %v687
        %v766 = vpop.f32.mrb[0].mxu0
        %v767 = vadd.f32 %v672, %v766
        %v768 = vpop.f32.mrb[0].mxu0
        %769 = vmatprep.mubr.f32.mxu0 0.0
        %770 = vmatmul.mubr.f32.gmra.mrb[0].mxu0 %v690
        %v771 = vpop.f32.mrb[0].mxu0
        %v772 = vadd.f32 %v676, %v771
        %v773 = vpop.f32.mrb[0].mxu0
        %774 = vmatprep.mubr.f32.mxu0 0.0
        %775 = vmatmul.mubr.f32.gmra.mrb[0].mxu0 %v693
        %v776 = vpop.f32.mrb[0].mxu0
        %v777 = vadd.f32 %v680, %v776
        %v778 = vpop.f32.mrb[0].mxu0
        %779 = vdwg.mxu0
        %v780 = vld [vmem:[%s5] sm:$0xff]
        %v781 = vld [vmem:[%s5 + $0x8] sm:$0xff]
        %v782 = vld [vmem:[%s5 + $0x10] sm:$0xff]
        %v783 = vld [vmem:[%s5 + $0x18] sm:$0xff]
        %v784 = vld [vmem:[%s515] sm:$0xff]
        %v785 = vld [vmem:[%s515 + $0x8] sm:$0xff]
        %v786 = vld [vmem:[%s515 + $0x10] sm:$0xff]
        %787 = vset.pattern.permute.xlu0 1
        %788 = vperm.xlu0 %787, %v526
        %v789 = vpop.permute.xlu0 %788
        %791 = vset.pattern.permute.xlu0 1
        %792 = vperm.xlu0 %791, %v527
        %v793 = vpop.permute.xlu0 %792
        %795 = vset.pattern.permute.xlu0 1
        %796 = vperm.xlu0 %795, %v528
        %v797 = vpop.permute.xlu0 %796
        %799 = vset.pattern.permute.xlu0 1
        %800 = vperm.xlu0 %799, %v529
        %v801 = vpop.permute.xlu0 %800
        %vm803 = vcmask 195584
        %v805 = vsel %vm803, %v780, 0
        %v808 = vsel %vm803, %v781, 0
        %v811 = vsel %vm803, %v782, 0
        %v814 = vsel %vm803, %v783, 0
        %816 = vmatprep.subr.mxu0 0.0
        %817 = vmatpush1.msra.mxu0 %v784
        %818 = vmatprep.subr.mxu0 0.0
        %819 = vmatpush1.msra.mxu0 %v785
        %820 = vmatprep.subr.mxu0 0.0
        %821 = vmatpush1.msra.mxu0 %v786
        %822 = vmatprep.subr.mxu0 0.0
        %823 = vmatpush1.msra.mxu0 0.0
        %824 = vmatprep.subr.mxu0 0.0
        %825 = vmatpush1.msra.mxu0 0.0
        %826 = vmatprep.subr.mxu0 0.0
        %827 = vmatpush1.msra.mxu0 0.0
        %828 = vmatprep.subr.mxu0 0.0
        %829 = vmatpush1.msra.mxu0 0.0
        %830 = vmatprep.subr.mxu0 0.0
        %831 = vmatpush1.msra.mxu0 0.0
        %832 = vmatprep.subr.mxu0 0.0
        %833 = vmatpush1.msra.mxu0 0.0
        %834 = vmatprep.subr.mxu0 0.0
        %835 = vmatpush1.msra.mxu0 0.0
        %836 = vmatprep.subr.mxu0 0.0
        %837 = vmatpush1.msra.mxu0 0.0
        %838 = vmatprep.subr.mxu0 0.0
        %839 = vmatpush1.msra.mxu0 0.0
        %840 = vmatprep.subr.mxu0 0.0
        %841 = vmatpush1.msra.mxu0 0.0
        %842 = vmatprep.subr.mxu0 0.0
        %843 = vmatpush1.msra.mxu0 0.0
        %844 = vmatprep.subr.mxu0 0.0
        %845 = vmatpush1.msra.mxu0 0.0
        %846 = vmatprep.subr.mxu0 0.0
        %847 = vmatpush1.msra.mxu0 0.0
        %848 = vmatprep.subr.mxu0 0.0
        %849 = vmatpush1.msra.mxu0 0.0
        %850 = vmatprep.subr.mxu0 0.0
        %851 = vmatpush1.msra.mxu0 0.0
        %852 = vmatprep.subr.mxu0 0.0
        %853 = vmatpush1.msra.mxu0 0.0
        %854 = vmatprep.subr.mxu0 0.0
        %855 = vmatpush1.msra.mxu0 0.0
        %856 = vmatprep.subr.mxu0 0.0
        %857 = vmatpush1.msra.mxu0 0.0
        %858 = vmatprep.subr.mxu0 0.0
        %859 = vmatpush1.msra.mxu0 0.0
        %860 = vmatprep.subr.mxu0 0.0
        %861 = vmatpush1.msra.mxu0 0.0
        %862 = vmatprep.subr.mxu0 0.0
        %863 = vmatpush1.msra.mxu0 0.0
        %864 = vmatprep.subr.mxu0 0.0
        %865 = vmatpush1.msra.mxu0 0.0
        %866 = vmatprep.subr.mxu0 0.0
        %867 = vmatpush1.msra.mxu0 0.0
        %868 = vmatprep.subr.mxu0 0.0
        %869 = vmatpush1.msra.mxu0 0.0
        %870 = vmatprep.subr.mxu0 0.0
        %871 = vmatpush1.msra.mxu0 0.0
        %872 = vmatprep.subr.mxu0 0.0
        %873 = vmatpush1.msra.mxu0 0.0
        %874 = vmatprep.subr.mxu0 0.0
        %875 = vmatpush1.msra.mxu0 0.0
        %876 = vmatprep.subr.mxu0 0.0
        %877 = vmatpush1.msra.mxu0 0.0
        %878 = vmatprep.subr.mxu0 0.0
        %879 = vmatpush1.msra.mxu0 0.0
        %880 = vmatprep.mubr.f32.mxu0 0.0
        %881 = vmatmul.mubr.f32.gmra.mrb[0].mxu0 %v805
        %v882 = vpop.f32.mrb[0].mxu0
        %v883 = vadd.f32 %v789, %v882
        %v884 = vpop.f32.mrb[0].mxu0
        %885 = vmatprep.mubr.f32.mxu0 0.0
        %886 = vmatmul.mubr.f32.gmra.mrb[0].mxu0 %v808
        %v887 = vpop.f32.mrb[0].mxu0
        %v888 = vadd.f32 %v793, %v887
        %v889 = vpop.f32.mrb[0].mxu0
        %890 = vmatprep.mubr.f32.mxu0 0.0
        %891 = vmatmul.mubr.f32.gmra.mrb[0].mxu0 %v811
        %v892 = vpop.f32.mrb[0].mxu0
        %v893 = vadd.f32 %v797, %v892
        %v894 = vpop.f32.mrb[0].mxu0
        %895 = vmatprep.mubr.f32.mxu0 0.0
        %896 = vmatmul.mubr.f32.gmra.mrb[0].mxu0 %v814
        %v897 = vpop.f32.mrb[0].mxu0
        %v898 = vadd.f32 %v801, %v897
        %v899 = vpop.f32.mrb[0].mxu0
        %900 = vdwg.mxu0
        %v901 = vld [vmem:[%s4] sm:$0xff]
        %v902 = vld [vmem:[%s4 + $0x8] sm:$0xff]
        %v903 = vld [vmem:[%s4 + $0x10] sm:$0xff]
        %v904 = vld [vmem:[%s4 + $0x18] sm:$0xff]
        %v905 = vld [vmem:[%s510] sm:$0xff]
        %v906 = vld [vmem:[%s510 + $0x8] sm:$0xff]
        %907 = vset.pattern.permute.xlu0 0
        %908 = vperm.xlu0 %907, %v526
        %v909 = vpop.permute.xlu0 %908
        %911 = vset.pattern.permute.xlu0 0
        %912 = vperm.xlu0 %911, %v527
        %v913 = vpop.permute.xlu0 %912
        %915 = vset.pattern.permute.xlu0 0
        %916 = vperm.xlu0 %915, %v528
        %v917 = vpop.permute.xlu0 %916
        %919 = vset.pattern.permute.xlu0 0
        %920 = vperm.xlu0 %919, %v529
        %v921 = vpop.permute.xlu0 %920
        %vm923 = vcmask 130048
        %v925 = vsel %vm923, %v901, 0
        %v928 = vsel %vm923, %v902, 0
        %v931 = vsel %vm923, %v903, 0
        %v934 = vsel %vm923, %v904, 0
        %936 = vmatprep.subr.mxu0 0.0
        %937 = vmatpush1.msra.mxu0 %v905
        %938 = vmatprep.subr.mxu0 0.0
        %939 = vmatpush1.msra.mxu0 %v906
        %940 = vmatprep.subr.mxu0 0.0
        %941 = vmatpush1.msra.mxu0 0.0
        %942 = vmatprep.subr.mxu0 0.0
        %943 = vmatpush1.msra.mxu0 0.0
        %944 = vmatprep.subr.mxu0 0.0
        %945 = vmatpush1.msra.mxu0 0.0
        %946 = vmatprep.subr.mxu0 0.0
        %947 = vmatpush1.msra.mxu0 0.0
        %948 = vmatprep.subr.mxu0 0.0
        %949 = vmatpush1.msra.mxu0 0.0
        %950 = vmatprep.subr.mxu0 0.0
        %951 = vmatpush1.msra.mxu0 0.0
        %952 = vmatprep.subr.mxu0 0.0
        %953 = vmatpush1.msra.mxu0 0.0
        %954 = vmatprep.subr.mxu0 0.0
        %955 = vmatpush1.msra.mxu0 0.0
        %956 = vmatprep.subr.mxu0 0.0
        %957 = vmatpush1.msra.mxu0 0.0
        %958 = vmatprep.subr.mxu0 0.0
        %959 = vmatpush1.msra.mxu0 0.0
        %960 = vmatprep.subr.mxu0 0.0
        %961 = vmatpush1.msra.mxu0 0.0
        %962 = vmatprep.subr.mxu0 0.0
        %963 = vmatpush1.msra.mxu0 0.0
        %964 = vmatprep.subr.mxu0 0.0
        %965 = vmatpush1.msra.mxu0 0.0
        %966 = vmatprep.subr.mxu0 0.0
        %967 = vmatpush1.msra.mxu0 0.0
        %968 = vmatprep.subr.mxu0 0.0
        %969 = vmatpush1.msra.mxu0 0.0
        %970 = vmatprep.subr.mxu0 0.0
        %971 = vmatpush1.msra.mxu0 0.0
        %972 = vmatprep.subr.mxu0 0.0
        %973 = vmatpush1.msra.mxu0 0.0
        %974 = vmatprep.subr.mxu0 0.0
        %975 = vmatpush1.msra.mxu0 0.0
        %976 = vmatprep.subr.mxu0 0.0
        %977 = vmatpush1.msra.mxu0 0.0
        %978 = vmatprep.subr.mxu0 0.0
        %979 = vmatpush1.msra.mxu0 0.0
        %980 = vmatprep.subr.mxu0 0.0
        %981 = vmatpush1.msra.mxu0 0.0
        %982 = vmatprep.subr.mxu0 0.0
        %983 = vmatpush1.msra.mxu0 0.0
        %984 = vmatprep.subr.mxu0 0.0
        %985 = vmatpush1.msra.mxu0 0.0
        %986 = vmatprep.subr.mxu0 0.0
        %987 = vmatpush1.msra.mxu0 0.0
        %988 = vmatprep.subr.mxu0 0.0
        %989 = vmatpush1.msra.mxu0 0.0
        %990 = vmatprep.subr.mxu0 0.0
        %991 = vmatpush1.msra.mxu0 0.0
        %992 = vmatprep.subr.mxu0 0.0
        %993 = vmatpush1.msra.mxu0 0.0
        %994 = vmatprep.subr.mxu0 0.0
        %995 = vmatpush1.msra.mxu0 0.0
        %996 = vmatprep.subr.mxu0 0.0
        %997 = vmatpush1.msra.mxu0 0.0
        %998 = vmatprep.subr.mxu0 0.0
        %999 = vmatpush1.msra.mxu0 0.0
        %1000 = vmatprep.mubr.f32.mxu0 0.0
        %1001 = vmatmul.mubr.f32.gmra.mrb[0].mxu0 %v925
        %v1002 = vpop.f32.mrb[0].mxu0
        %v1003 = vadd.f32 %v909, %v1002
        %v1004 = vpop.f32.mrb[0].mxu0
        %1005 = vmatprep.mubr.f32.mxu0 0.0
        %1006 = vmatmul.mubr.f32.gmra.mrb[0].mxu0 %v928
        %v1007 = vpop.f32.mrb[0].mxu0
        %v1008 = vadd.f32 %v913, %v1007
        %v1009 = vpop.f32.mrb[0].mxu0
        %1010 = vmatprep.mubr.f32.mxu0 0.0
        %1011 = vmatmul.mubr.f32.gmra.mrb[0].mxu0 %v931
        %v1012 = vpop.f32.mrb[0].mxu0
        %v1013 = vadd.f32 %v917, %v1012
        %v1014 = vpop.f32.mrb[0].mxu0
        %1015 = vmatprep.mubr.f32.mxu0 0.0
        %1016 = vmatmul.mubr.f32.gmra.mrb[0].mxu0 %v934
        %v1017 = vpop.f32.mrb[0].mxu0
        %v1018 = vadd.f32 %v921, %v1017
        %v1019 = vpop.f32.mrb[0].mxu0
        %1020 = vdwg.mxu0
        %v1021 = vld [vmem:[%s11] sm:$0xf]
        %vm1022 = vcmask 31744
        %v1024 = vsel %vm1022, %v640, 0
        %v1027 = vsel %vm1022, %v645, 0
        %v1030 = vsel %vm1022, %v650, 0
        %v1033 = vsel %vm1022, %v655, 0
        %vm1035 = vcmask 1043456
        %v1037 = vsel %vm1035, %v1021, 0
        %1039 = vmatprep.subr.mxu0 0.0
        %1040 = vmatpush1.msra.mxu0 %v1037
        %1041 = vmatprep.subr.mxu0 0.0
        %1042 = vmatpush1.msra.mxu0 0.0
        %1043 = vmatprep.subr.mxu0 0.0
        %1044 = vmatpush1.msra.mxu0 0.0
        %1045 = vmatprep.subr.mxu0 0.0
        %1046 = vmatpush1.msra.mxu0 0.0
        %1047 = vmatprep.subr.mxu0 0.0
        %1048 = vmatpush1.msra.mxu0 0.0
        %1049 = vmatprep.subr.mxu0 0.0
        %1050 = vmatpush1.msra.mxu0 0.0
        %1051 = vmatprep.subr.mxu0 0.0
        %1052 = vmatpush1.msra.mxu0 0.0
        %1053 = vmatprep.subr.mxu0 0.0
        %1054 = vmatpush1.msra.mxu0 0.0
        %1055 = vmatprep.subr.mxu0 0.0
        %1056 = vmatpush1.msra.mxu0 0.0
        %1057 = vmatprep.subr.mxu0 0.0
        %1058 = vmatpush1.msra.mxu0 0.0
        %1059 = vmatprep.subr.mxu0 0.0
        %1060 = vmatpush1.msra.mxu0 0.0
        %1061 = vmatprep.subr.mxu0 0.0
        %1062 = vmatpush1.msra.mxu0 0.0
        %1063 = vmatprep.subr.mxu0 0.0
        %1064 = vmatpush1.msra.mxu0 0.0
        %1065 = vmatprep.subr.mxu0 0.0
        %1066 = vmatpush1.msra.mxu0 0.0
        %1067 = vmatprep.subr.mxu0 0.0
        %1068 = vmatpush1.msra.mxu0 0.0
        %1069 = vmatprep.subr.mxu0 0.0
        %1070 = vmatpush1.msra.mxu0 0.0
        %1071 = vmatprep.subr.mxu0 0.0
        %1072 = vmatpush1.msra.mxu0 0.0
        %1073 = vmatprep.subr.mxu0 0.0
        %1074 = vmatpush1.msra.mxu0 0.0
        %1075 = vmatprep.subr.mxu0 0.0
        %1076 = vmatpush1.msra.mxu0 0.0
        %1077 = vmatprep.subr.mxu0 0.0
        %1078 = vmatpush1.msra.mxu0 0.0
        %1079 = vmatprep.subr.mxu0 0.0
        %1080 = vmatpush1.msra.mxu0 0.0
        %1081 = vmatprep.subr.mxu0 0.0
        %1082 = vmatpush1.msra.mxu0 0.0
        %1083 = vmatprep.subr.mxu0 0.0
        %1084 = vmatpush1.msra.mxu0 0.0
        %1085 = vmatprep.subr.mxu0 0.0
        %1086 = vmatpush1.msra.mxu0 0.0
        %1087 = vmatprep.subr.mxu0 0.0
        %1088 = vmatpush1.msra.mxu0 0.0
        %1089 = vmatprep.subr.mxu0 0.0
        %1090 = vmatpush1.msra.mxu0 0.0
        %1091 = vmatprep.subr.mxu0 0.0
        %1092 = vmatpush1.msra.mxu0 0.0
        %1093 = vmatprep.subr.mxu0 0.0
        %1094 = vmatpush1.msra.mxu0 0.0
        %1095 = vmatprep.subr.mxu0 0.0
        %1096 = vmatpush1.msra.mxu0 0.0
        %1097 = vmatprep.subr.mxu0 0.0
        %1098 = vmatpush1.msra.mxu0 0.0
        %1099 = vmatprep.subr.mxu0 0.0
        %1100 = vmatpush1.msra.mxu0 0.0
        %1101 = vmatprep.subr.mxu0 0.0
        %1102 = vmatpush1.msra.mxu0 0.0
        %1103 = vmatprep.mubr.f32.mxu0 0.0
        %1104 = vmatmul.mubr.f32.gmra.mrb[0].mxu0 %v1024
        %v1105 = vpop.f32.mrb[0].mxu0
        %v1106 = vadd.f32 0.0, %v1105
        %v1107 = vpop.f32.mrb[0].mxu0
        %1108 = vmatprep.mubr.f32.mxu0 0.0
        %1109 = vmatmul.mubr.f32.gmra.mrb[0].mxu0 %v1027
        %v1110 = vpop.f32.mrb[0].mxu0
        %v1111 = vadd.f32 0.0, %v1110
        %v1112 = vpop.f32.mrb[0].mxu0
        %1113 = vmatprep.mubr.f32.mxu0 0.0
        %1114 = vmatmul.mubr.f32.gmra.mrb[0].mxu0 %v1030
        %v1115 = vpop.f32.mrb[0].mxu0
        %v1116 = vadd.f32 0.0, %v1115
        %v1117 = vpop.f32.mrb[0].mxu0
        %1118 = vmatprep.mubr.f32.mxu0 0.0
        %1119 = vmatmul.mubr.f32.gmra.mrb[0].mxu0 %v1033
        %v1120 = vpop.f32.mrb[0].mxu0
        %v1121 = vadd.f32 0.0, %v1120
        %v1122 = vpop.f32.mrb[0].mxu0
        %1123 = vdwg.mxu0
        %v1124 = vld [vmem:[%s10] sm:$0xff]
        %vm1125 = vcmask 64512
        %v1127 = vsel %vm1125, %v762, 0
        %v1130 = vsel %vm1125, %v767, 0
        %v1133 = vsel %vm1125, %v772, 0
        %v1136 = vsel %vm1125, %v777, 0
        %1138 = vmatprep.subr.mxu0 0.0
        %1139 = vmatpush1.msra.mxu0 %v1124
        %1140 = vmatprep.subr.mxu0 0.0
        %1141 = vmatpush1.msra.mxu0 0.0
        %1142 = vmatprep.subr.mxu0 0.0
        %1143 = vmatpush1.msra.mxu0 0.0
        %1144 = vmatprep.subr.mxu0 0.0
        %1145 = vmatpush1.msra.mxu0 0.0
        %1146 = vmatprep.subr.mxu0 0.0
        %1147 = vmatpush1.msra.mxu0 0.0
        %1148 = vmatprep.subr.mxu0 0.0
        %1149 = vmatpush1.msra.mxu0 0.0
        %1150 = vmatprep.subr.mxu0 0.0
        %1151 = vmatpush1.msra.mxu0 0.0
        %1152 = vmatprep.subr.mxu0 0.0
        %1153 = vmatpush1.msra.mxu0 0.0
        %1154 = vmatprep.subr.mxu0 0.0
        %1155 = vmatpush1.msra.mxu0 0.0
        %1156 = vmatprep.subr.mxu0 0.0
        %1157 = vmatpush1.msra.mxu0 0.0
        %1158 = vmatprep.subr.mxu0 0.0
        %1159 = vmatpush1.msra.mxu0 0.0
        %1160 = vmatprep.subr.mxu0 0.0
        %1161 = vmatpush1.msra.mxu0 0.0
        %1162 = vmatprep.subr.mxu0 0.0
        %1163 = vmatpush1.msra.mxu0 0.0
        %1164 = vmatprep.subr.mxu0 0.0
        %1165 = vmatpush1.msra.mxu0 0.0
        %1166 = vmatprep.subr.mxu0 0.0
        %1167 = vmatpush1.msra.mxu0 0.0
        %1168 = vmatprep.subr.mxu0 0.0
        %1169 = vmatpush1.msra.mxu0 0.0
        %1170 = vmatprep.subr.mxu0 0.0
        %1171 = vmatpush1.msra.mxu0 0.0
        %1172 = vmatprep.subr.mxu0 0.0
        %1173 = vmatpush1.msra.mxu0 0.0
        %1174 = vmatprep.subr.mxu0 0.0
        %1175 = vmatpush1.msra.mxu0 0.0
        %1176 = vmatprep.subr.mxu0 0.0
        %1177 = vmatpush1.msra.mxu0 0.0
        %1178 = vmatprep.subr.mxu0 0.0
        %1179 = vmatpush1.msra.mxu0 0.0
        %1180 = vmatprep.subr.mxu0 0.0
        %1181 = vmatpush1.msra.mxu0 0.0
        %1182 = vmatprep.subr.mxu0 0.0
        %1183 = vmatpush1.msra.mxu0 0.0
        %1184 = vmatprep.subr.mxu0 0.0
        %1185 = vmatpush1.msra.mxu0 0.0
        %1186 = vmatprep.subr.mxu0 0.0
        %1187 = vmatpush1.msra.mxu0 0.0
        %1188 = vmatprep.subr.mxu0 0.0
        %1189 = vmatpush1.msra.mxu0 0.0
        %1190 = vmatprep.subr.mxu0 0.0
        %1191 = vmatpush1.msra.mxu0 0.0
        %1192 = vmatprep.subr.mxu0 0.0
        %1193 = vmatpush1.msra.mxu0 0.0
        %1194 = vmatprep.subr.mxu0 0.0
        %1195 = vmatpush1.msra.mxu0 0.0
        %1196 = vmatprep.subr.mxu0 0.0
        %1197 = vmatpush1.msra.mxu0 0.0
        %1198 = vmatprep.subr.mxu0 0.0
        %1199 = vmatpush1.msra.mxu0 0.0
        %1200 = vmatprep.subr.mxu0 0.0
        %1201 = vmatpush1.msra.mxu0 0.0
        %1202 = vmatprep.mubr.f32.mxu0 0.0
        %1203 = vmatmul.mubr.f32.gmra.mrb[0].mxu0 %v1127
        %v1204 = vpop.f32.mrb[0].mxu0
        %v1205 = vadd.f32 0.0, %v1204
        %v1206 = vpop.f32.mrb[0].mxu0
        %1207 = vmatprep.mubr.f32.mxu0 0.0
        %1208 = vmatmul.mubr.f32.gmra.mrb[0].mxu0 %v1130
        %v1209 = vpop.f32.mrb[0].mxu0
        %v1210 = vadd.f32 0.0, %v1209
        %v1211 = vpop.f32.mrb[0].mxu0
        %1212 = vmatprep.mubr.f32.mxu0 0.0
        %1213 = vmatmul.mubr.f32.gmra.mrb[0].mxu0 %v1133
        %v1214 = vpop.f32.mrb[0].mxu0
        %v1215 = vadd.f32 0.0, %v1214
        %v1216 = vpop.f32.mrb[0].mxu0
        %1217 = vmatprep.mubr.f32.mxu0 0.0
        %1218 = vmatmul.mubr.f32.gmra.mrb[0].mxu0 %v1136
        %v1219 = vpop.f32.mrb[0].mxu0
        %v1220 = vadd.f32 0.0, %v1219
        %v1221 = vpop.f32.mrb[0].mxu0
        %1222 = vdwg.mxu0
        %v1223 = vld [vmem:[%s9] sm:$0xff]
        %v1225 = vsel %vm1125, %v883, 0
        %v1228 = vsel %vm1125, %v888, 0
        %v1231 = vsel %vm1125, %v893, 0
        %v1234 = vsel %vm1125, %v898, 0
        %1236 = vmatprep.subr.mxu0 0.0
        %1237 = vmatpush1.msra.mxu0 %v1223
        %1238 = vmatprep.subr.mxu0 0.0
        %1239 = vmatpush1.msra.mxu0 0.0
        %1240 = vmatprep.subr.mxu0 0.0
        %1241 = vmatpush1.msra.mxu0 0.0
        %1242 = vmatprep.subr.mxu0 0.0
        %1243 = vmatpush1.msra.mxu0 0.0
        %1244 = vmatprep.subr.mxu0 0.0
        %1245 = vmatpush1.msra.mxu0 0.0
        %1246 = vmatprep.subr.mxu0 0.0
        %1247 = vmatpush1.msra.mxu0 0.0
        %1248 = vmatprep.subr.mxu0 0.0
        %1249 = vmatpush1.msra.mxu0 0.0
        %1250 = vmatprep.subr.mxu0 0.0
        %1251 = vmatpush1.msra.mxu0 0.0
        %1252 = vmatprep.subr.mxu0 0.0
        %1253 = vmatpush1.msra.mxu0 0.0
        %1254 = vmatprep.subr.mxu0 0.0
        %1255 = vmatpush1.msra.mxu0 0.0
        %1256 = vmatprep.subr.mxu0 0.0
        %1257 = vmatpush1.msra.mxu0 0.0
        %1258 = vmatprep.subr.mxu0 0.0
        %1259 = vmatpush1.msra.mxu0 0.0
        %1260 = vmatprep.subr.mxu0 0.0
        %1261 = vmatpush1.msra.mxu0 0.0
        %1262 = vmatprep.subr.mxu0 0.0
        %1263 = vmatpush1.msra.mxu0 0.0
        %1264 = vmatprep.subr.mxu0 0.0
        %1265 = vmatpush1.msra.mxu0 0.0
        %1266 = vmatprep.subr.mxu0 0.0
        %1267 = vmatpush1.msra.mxu0 0.0
        %1268 = vmatprep.subr.mxu0 0.0
        %1269 = vmatpush1.msra.mxu0 0.0
        %1270 = vmatprep.subr.mxu0 0.0
        %1271 = vmatpush1.msra.mxu0 0.0
        %1272 = vmatprep.subr.mxu0 0.0
        %1273 = vmatpush1.msra.mxu0 0.0
        %1274 = vmatprep.subr.mxu0 0.0
        %1275 = vmatpush1.msra.mxu0 0.0
        %1276 = vmatprep.subr.mxu0 0.0
        %1277 = vmatpush1.msra.mxu0 0.0
        %1278 = vmatprep.subr.mxu0 0.0
        %1279 = vmatpush1.msra.mxu0 0.0
        %1280 = vmatprep.subr.mxu0 0.0
        %1281 = vmatpush1.msra.mxu0 0.0
        %1282 = vmatprep.subr.mxu0 0.0
        %1283 = vmatpush1.msra.mxu0 0.0
        %1284 = vmatprep.subr.mxu0 0.0
        %1285 = vmatpush1.msra.mxu0 0.0
        %1286 = vmatprep.subr.mxu0 0.0
        %1287 = vmatpush1.msra.mxu0 0.0
        %1288 = vmatprep.subr.mxu0 0.0
        %1289 = vmatpush1.msra.mxu0 0.0
        %1290 = vmatprep.subr.mxu0 0.0
        %1291 = vmatpush1.msra.mxu0 0.0
        %1292 = vmatprep.subr.mxu0 0.0
        %1293 = vmatpush1.msra.mxu0 0.0
        %1294 = vmatprep.subr.mxu0 0.0
        %1295 = vmatpush1.msra.mxu0 0.0
        %1296 = vmatprep.subr.mxu0 0.0
        %1297 = vmatpush1.msra.mxu0 0.0
        %1298 = vmatprep.subr.mxu0 0.0
        %1299 = vmatpush1.msra.mxu0 0.0
        %1300 = vmatprep.mubr.f32.mxu0 0.0
        %1301 = vmatmul.mubr.f32.gmra.mrb[0].mxu0 %v1225
        %v1302 = vpop.f32.mrb[0].mxu0
        %v1303 = vadd.f32 0.0, %v1302
        %v1304 = vpop.f32.mrb[0].mxu0
        %1305 = vmatprep.mubr.f32.mxu0 0.0
        %1306 = vmatmul.mubr.f32.gmra.mrb[0].mxu0 %v1228
        %v1307 = vpop.f32.mrb[0].mxu0
        %v1308 = vadd.f32 0.0, %v1307
        %v1309 = vpop.f32.mrb[0].mxu0
        %1310 = vmatprep.mubr.f32.mxu0 0.0
        %1311 = vmatmul.mubr.f32.gmra.mrb[0].mxu0 %v1231
        %v1312 = vpop.f32.mrb[0].mxu0
        %v1313 = vadd.f32 0.0, %v1312
        %v1314 = vpop.f32.mrb[0].mxu0
        %1315 = vmatprep.mubr.f32.mxu0 0.0
        %1316 = vmatmul.mubr.f32.gmra.mrb[0].mxu0 %v1234
        %v1317 = vpop.f32.mrb[0].mxu0
        %v1318 = vadd.f32 0.0, %v1317
        %v1319 = vpop.f32.mrb[0].mxu0
        %1320 = vdwg.mxu0
        %v1321 = vld [vmem:[%s12] sm:$0xff]
        %v1322 = vld [vmem:[%s12 + $0x8] sm:$0xff]
        %v1323 = vld [vmem:[%s12 + $0x10] sm:$0xff]
        %v1324 = vld [vmem:[%s12 + $0x18] sm:$0xff]
        %v1325 = vld [vmem:[%s12 + $0x20] sm:$0xff]
        %v1326 = vld [vmem:[%s12 + $0x28] sm:$0xff]
        %v1327 = vld [vmem:[%s12 + $0x30] sm:$0xff]
        %v1328 = vld [vmem:[%s12 + $0x38] sm:$0xff]
        %v1329 = vld [vmem:[%s12 + $0x40] sm:$0xff]
        %v1330 = vld [vmem:[%s12 + $0x48] sm:$0xff]
        %v1331 = vld [vmem:[%s12 + $0x50] sm:$0xff]
        %v1332 = vld [vmem:[%s12 + $0x58] sm:$0xff]
        %v1333 = vld [vmem:[%s13] sm:$0xff]
        %v1334 = vld [vmem:[%s13 + $0x8] sm:$0xff]
        %v1335 = vld [vmem:[%s13 + $0x10] sm:$0xff]
        %v1336 = vld [vmem:[%s13 + $0x18] sm:$0xff]
        %v1337 = vld [vmem:[%s13 + $0x20] sm:$0xff]
        %v1338 = vld [vmem:[%s13 + $0x28] sm:$0xff]
        %v1339 = vld [vmem:[%s13 + $0x30] sm:$0xff]
        %v1340 = vld [vmem:[%s13 + $0x38] sm:$0xff]
        %v1341 = vld [vmem:[%s13 + $0x40] sm:$0xff]
        %v1342 = vld [vmem:[%s13 + $0x48] sm:$0xff]
        %v1343 = vld [vmem:[%s13 + $0x50] sm:$0xff]
        %v1344 = vld [vmem:[%s13 + $0x58] sm:$0xff]
        %1346 = vset.pattern.permute.xlu0 0
        %1347 = vperm.xlu0 %1346, %v1333
        %v1348 = vpop.permute.xlu0 %1347
        %1351 = vset.pattern.permute.xlu0 0
        %1352 = vperm.xlu0 %1351, %v1334
        %v1353 = vpop.permute.xlu0 %1352
        %1356 = vset.pattern.permute.xlu0 0
        %1357 = vperm.xlu0 %1356, %v1335
        %v1358 = vpop.permute.xlu0 %1357
        %1361 = vset.pattern.permute.xlu0 0
        %1362 = vperm.xlu0 %1361, %v1336
        %v1363 = vpop.permute.xlu0 %1362
        %1366 = vset.pattern.permute.xlu0 0
        %1367 = vperm.xlu0 %1366, %v1337
        %v1368 = vpop.permute.xlu0 %1367
        %1371 = vset.pattern.permute.xlu0 0
        %1372 = vperm.xlu0 %1371, %v1338
        %v1373 = vpop.permute.xlu0 %1372
        %1376 = vset.pattern.permute.xlu0 0
        %1377 = vperm.xlu0 %1376, %v1339
        %v1378 = vpop.permute.xlu0 %1377
        %1381 = vset.pattern.permute.xlu0 0
        %1382 = vperm.xlu0 %1381, %v1340
        %v1383 = vpop.permute.xlu0 %1382
        %1386 = vset.pattern.permute.xlu0 0
        %1387 = vperm.xlu0 %1386, %v1341
        %v1388 = vpop.permute.xlu0 %1387
        %1391 = vset.pattern.permute.xlu0 0
        %1392 = vperm.xlu0 %1391, %v1342
        %v1393 = vpop.permute.xlu0 %1392
        %1396 = vset.pattern.permute.xlu0 0
        %1397 = vperm.xlu0 %1396, %v1343
        %v1398 = vpop.permute.xlu0 %1397
        %1401 = vset.pattern.permute.xlu0 0
        %1402 = vperm.xlu0 %1401, %v1344
        %v1403 = vpop.permute.xlu0 %1402
        %v1406 = vsel %vm682, %v1321, 0
        %v1409 = vsel %vm682, %v1322, 0
        %v1412 = vsel %vm682, %v1323, 0
        %v1415 = vsel %vm682, %v1324, 0
        %v1418 = vsel %vm682, %v1325, 0
        %v1421 = vsel %vm682, %v1326, 0
        %v1424 = vsel %vm682, %v1327, 0
        %v1427 = vsel %vm682, %v1328, 0
        %v1430 = vsel %vm682, %v1329, 0
        %v1433 = vsel %vm682, %v1330, 0
        %v1436 = vsel %vm682, %v1331, 0
        %v1439 = vsel %vm682, %v1332, 0
        %1441 = vmatprep.subr.mxu0 0.0
        %1442 = vmatpush1.msra.mxu0 %v1106
        %1443 = vmatprep.subr.mxu0 0.0
        %1444 = vmatpush1.msra.mxu0 %v1111
        %1445 = vmatprep.subr.mxu0 0.0
        %1446 = vmatpush1.msra.mxu0 %v1116
        %1447 = vmatprep.subr.mxu0 0.0
        %1448 = vmatpush1.msra.mxu0 %v1121
        %1449 = vmatprep.subr.mxu0 0.0
        %1450 = vmatpush1.msra.mxu0 0.0
        %1451 = vmatprep.subr.mxu0 0.0
        %1452 = vmatpush1.msra.mxu0 0.0
        %1453 = vmatprep.subr.mxu0 0.0
        %1454 = vmatpush1.msra.mxu0 0.0
        %1455 = vmatprep.subr.mxu0 0.0
        %1456 = vmatpush1.msra.mxu0 0.0
        %1457 = vmatprep.subr.mxu0 0.0
        %1458 = vmatpush1.msra.mxu0 0.0
        %1459 = vmatprep.subr.mxu0 0.0
        %1460 = vmatpush1.msra.mxu0 0.0
        %1461 = vmatprep.subr.mxu0 0.0
        %1462 = vmatpush1.msra.mxu0 0.0
        %1463 = vmatprep.subr.mxu0 0.0
        %1464 = vmatpush1.msra.mxu0 0.0
        %1465 = vmatprep.subr.mxu0 0.0
        %1466 = vmatpush1.msra.mxu0 0.0
        %1467 = vmatprep.subr.mxu0 0.0
        %1468 = vmatpush1.msra.mxu0 0.0
        %1469 = vmatprep.subr.mxu0 0.0
        %1470 = vmatpush1.msra.mxu0 0.0
        %1471 = vmatprep.subr.mxu0 0.0
        %1472 = vmatpush1.msra.mxu0 0.0
        %1473 = vmatprep.subr.mxu0 0.0
        %1474 = vmatpush1.msra.mxu0 0.0
        %1475 = vmatprep.subr.mxu0 0.0
        %1476 = vmatpush1.msra.mxu0 0.0
        %1477 = vmatprep.subr.mxu0 0.0
        %1478 = vmatpush1.msra.mxu0 0.0
        %1479 = vmatprep.subr.mxu0 0.0
        %1480 = vmatpush1.msra.mxu0 0.0
        %1481 = vmatprep.subr.mxu0 0.0
        %1482 = vmatpush1.msra.mxu0 0.0
        %1483 = vmatprep.subr.mxu0 0.0
        %1484 = vmatpush1.msra.mxu0 0.0
        %1485 = vmatprep.subr.mxu0 0.0
        %1486 = vmatpush1.msra.mxu0 0.0
        %1487 = vmatprep.subr.mxu0 0.0
        %1488 = vmatpush1.msra.mxu0 0.0
        %1489 = vmatprep.subr.mxu0 0.0
        %1490 = vmatpush1.msra.mxu0 0.0
        %1491 = vmatprep.subr.mxu0 0.0
        %1492 = vmatpush1.msra.mxu0 0.0
        %1493 = vmatprep.subr.mxu0 0.0
        %1494 = vmatpush1.msra.mxu0 0.0
        %1495 = vmatprep.subr.mxu0 0.0
        %1496 = vmatpush1.msra.mxu0 0.0
        %1497 = vmatprep.subr.mxu0 0.0
        %1498 = vmatpush1.msra.mxu0 0.0
        %1499 = vmatprep.subr.mxu0 0.0
        %1500 = vmatpush1.msra.mxu0 0.0
        %1501 = vmatprep.subr.mxu0 0.0
        %1502 = vmatpush1.msra.mxu0 0.0
        %1503 = vmatprep.subr.mxu0 0.0
        %1504 = vmatpush1.msra.mxu0 0.0
        %1505 = vmatprep.mubr.f32.mxu0 0.0
        %1506 = vmatmul.mubr.f32.gmra.mrb[0].mxu0 %v1406
        %v1507 = vpop.f32.mrb[0].mxu0
        %v1508 = vadd.f32 %v1348, %v1507
        %v1509 = vpop.f32.mrb[0].mxu0
        %1510 = vmatprep.mubr.f32.mxu0 0.0
        %1511 = vmatmul.mubr.f32.gmra.mrb[0].mxu0 %v1409
        %v1512 = vpop.f32.mrb[0].mxu0
        %v1513 = vadd.f32 %v1353, %v1512
        %v1514 = vpop.f32.mrb[0].mxu0
        %1515 = vmatprep.mubr.f32.mxu0 0.0
        %1516 = vmatmul.mubr.f32.gmra.mrb[0].mxu0 %v1412
        %v1517 = vpop.f32.mrb[0].mxu0
        %v1518 = vadd.f32 %v1358, %v1517
        %v1519 = vpop.f32.mrb[0].mxu0
        %1520 = vmatprep.mubr.f32.mxu0 0.0
        %1521 = vmatmul.mubr.f32.gmra.mrb[0].mxu0 %v1415
        %v1522 = vpop.f32.mrb[0].mxu0
        %v1523 = vadd.f32 %v1363, %v1522
        %v1524 = vpop.f32.mrb[0].mxu0
        %1525 = vmatprep.mubr.f32.mxu0 0.0
        %1526 = vmatmul.mubr.f32.gmra.mrb[0].mxu0 %v1418
        %v1527 = vpop.f32.mrb[0].mxu0
        %v1528 = vadd.f32 %v1368, %v1527
        %v1529 = vpop.f32.mrb[0].mxu0
        %1530 = vmatprep.mubr.f32.mxu0 0.0
        %1531 = vmatmul.mubr.f32.gmra.mrb[0].mxu0 %v1421
        %v1532 = vpop.f32.mrb[0].mxu0
        %v1533 = vadd.f32 %v1373, %v1532
        %v1534 = vpop.f32.mrb[0].mxu0
        %1535 = vmatprep.mubr.f32.mxu0 0.0
        %1536 = vmatmul.mubr.f32.gmra.mrb[0].mxu0 %v1424
        %v1537 = vpop.f32.mrb[0].mxu0
        %v1538 = vadd.f32 %v1378, %v1537
        %v1539 = vpop.f32.mrb[0].mxu0
        %1540 = vmatprep.mubr.f32.mxu0 0.0
        %1541 = vmatmul.mubr.f32.gmra.mrb[0].mxu0 %v1427
        %v1542 = vpop.f32.mrb[0].mxu0
        %v1543 = vadd.f32 %v1383, %v1542
        %v1544 = vpop.f32.mrb[0].mxu0
        %1545 = vmatprep.mubr.f32.mxu0 0.0
        %1546 = vmatmul.mubr.f32.gmra.mrb[0].mxu0 %v1430
        %v1547 = vpop.f32.mrb[0].mxu0
        %v1548 = vadd.f32 %v1388, %v1547
        %v1549 = vpop.f32.mrb[0].mxu0
        %1550 = vmatprep.mubr.f32.mxu0 0.0
        %1551 = vmatmul.mubr.f32.gmra.mrb[0].mxu0 %v1433
        %v1552 = vpop.f32.mrb[0].mxu0
        %v1553 = vadd.f32 %v1393, %v1552
        %v1554 = vpop.f32.mrb[0].mxu0
        %1555 = vmatprep.mubr.f32.mxu0 0.0
        %1556 = vmatmul.mubr.f32.gmra.mrb[0].mxu0 %v1436
        %v1557 = vpop.f32.mrb[0].mxu0
        %v1558 = vadd.f32 %v1398, %v1557
        %v1559 = vpop.f32.mrb[0].mxu0
        %1560 = vmatprep.mubr.f32.mxu0 0.0
        %1561 = vmatmul.mubr.f32.gmra.mrb[0].mxu0 %v1439
        %v1562 = vpop.f32.mrb[0].mxu0
        %v1563 = vadd.f32 %v1403, %v1562
        %v1564 = vpop.f32.mrb[0].mxu0
        %1565 = vdwg.mxu0
        %v1566 = vadd.f32 %v1508, %v1205
        %v1567 = vadd.f32 %v1513, %v1210
        %v1568 = vadd.f32 %v1518, %v1215
        %v1569 = vadd.f32 %v1523, %v1220
        %v1570 = vadd.f32 %v1528, %v1303
        %v1571 = vadd.f32 %v1533, %v1308
        %v1572 = vadd.f32 %v1538, %v1313
        %v1573 = vadd.f32 %v1543, %v1318
        %v1574 = vadd.f32 %v1548, %v1003
        %v1575 = vadd.f32 %v1553, %v1008
        %v1576 = vadd.f32 %v1558, %v1013
        %v1577 = vadd.f32 %v1563, %v1018
        %1578 = vxpose.xlu0.b32.start [1/16] %v1106, 128
        %1579 = vxpose.xlu0.b32.cont [2/16] %v1111, 128
        %1580 = vxpose.xlu0.b32.cont [3/16] %v1116, 128
        %1581 = vxpose.xlu0.b32.cont [4/16] %v1121, 128
        %1582 = vxpose.xlu0.b32.cont [5/16] %v1566, 128
        %1583 = vxpose.xlu0.b32.cont [6/16] %v1567, 128
        %1584 = vxpose.xlu0.b32.cont [7/16] %v1568, 128
        %1585 = vxpose.xlu0.b32.cont [8/16] %v1569, 128
        %1586 = vxpose.xlu0.b32.cont [9/16] %v1570, 128
        %1587 = vxpose.xlu0.b32.cont [10/16] %v1571, 128
        %1588 = vxpose.xlu0.b32.cont [11/16] %v1572, 128
        %1589 = vxpose.xlu0.b32.cont [12/16] %v1573, 128
        %1590 = vxpose.xlu0.b32.cont [13/16] %v1574, 128
        %1591 = vxpose.xlu0.b32.cont [14/16] %v1575, 128
        %1592 = vxpose.xlu0.b32.cont [15/16] %v1576, 128
        %1593 = vxpose.xlu0.b32.end [16/16] %v1577, 128
        %v1594 = vpop.trf.xlu0
        %v1595 = vpop.trf.xlu0
        %v1596 = vpop.trf.xlu0
        %v1597 = vpop.trf.xlu0
        %v1598 = vpop.trf.xlu0
        %v1599 = vpop.trf.xlu0
        %v1600 = vpop.trf.xlu0
        %v1601 = vpop.trf.xlu0
        %v1602 = vpop.trf.xlu0
        %v1603 = vpop.trf.xlu0
        %v1604 = vpop.trf.xlu0
        %v1605 = vpop.trf.xlu0
        %v1606 = vpop.trf.xlu0
        %v1607 = vpop.trf.xlu0
        %v1608 = vpop.trf.xlu0
        %v1609 = vpop.trf.xlu0
        %1610 = vst [vmem:[%s505] sm:$0xff] %v1594
        %1611 = vst [vmem:[%s505 + $0x8] sm:$0xff] %v1595
        %s1612 = sand.u32 %s350, 1
        %s1613 = scalar_lea.sflag [#allocation3], %s1612
        %s1614 = sand.u32 %s350, 1
        %s1615 = smul.addr %s1614, 16
        %s1616 = scalar_lea.vmem [#allocation2], %s1615
        // Predicated region
        $region77: #{tpu_custom_call.1} parent=75 // pred_check
          %p1617 = pneg %p360
        $region78: #{tpu_custom_call.1} parent=75 // pred_check_branch
          %1619 = sbr.rel (%p1617) target = $region80
        $region79: #{tpu_custom_call.1} parent=75 // pred_region
          %s1621 = ssub.s32 256, 256
          %1622 = vsyncadd %s1613, %s1621
          %s1623 = smul.addr %s28, 2
          %s1624 = smul.addr %s1623, 128
          %s1625 = scalar_lea.hbm %s14, %s1624
          %s1626 = sshll.u32 %s1616, 4
          %s1627 = int_to_ptr.vmem [resolvable:$true] %s1626
          %1632 = dma.vmem_to_hbm [thread:$0]  %s1627, 256, %s1625, %s1613, 128, 128, 8
        $region80: #{tpu_custom_call.1} parent=75 // pred_fallthru
          _
      $region76: #{tpu_custom_call.1} parent=5 // pred_fallthru
        _
      %p1633 = scmp.le.s32.totalorder 2, %s23
      // Predicated region
      $region81: #{tpu_custom_call.1} parent=5 // pred_check
        %p1634 = pneg %p1633
      $region82: #{tpu_custom_call.1} parent=5 // pred_check_branch
        %1636 = sbr.rel (%p1634) target = $region84
      $region83: #{tpu_custom_call.1} parent=5 // pred_region
        %s1637 = ssub.s32 %s23, 2
        // Predicated region
        $region85: #{tpu_custom_call.1} parent=83 // pred_check
          %p1638 = pneg %p366
        $region86: #{tpu_custom_call.1} parent=83 // pred_check_branch
          %1640 = sbr.rel (%p1638) target = $region88
        $region87: #{tpu_custom_call.1} parent=83 // pred_region
          %s1641 = sand.u32 %s351, 1
          %s1642 = scalar_lea.sflag [#allocation3], %s1641
          %s1643 = sand.u32 %s351, 1
          %s1644 = smul.addr %s1643, 16
          %s1645 = scalar_lea.vmem [#allocation2], %s1644
          %1646 = dma.done %s1642, 256
        $region88: #{tpu_custom_call.1} parent=83 // pred_fallthru
          _
      $region84: #{tpu_custom_call.1} parent=5 // pred_fallthru
        _
    $region6: #{tpu_custom_call.1} parent=1 // loop_footer
      %s27 = sadd.s32 1, %s23
    $region7: #{tpu_custom_call.1} parent=1 // loop_footer_branch
      %22 = sbr.rel target = $region3
    $region8: #{tpu_custom_call.1} parent=1 // loop_exit
      _
    %1647 = vsyncpa [#allocation3], 1
    %s1648 = scalar_lea.sflag [#allocation3], 1
    %1649 = vsyncpa %s1648, 1

</llo_original>
